<compile_context>
chip_gen: v7x
topology: tpu7x:2x2x1
jax: 0.10.0
libtpu: 0.0.40
codegen_flags: <defaults>
</compile_context>

<pallas_src>
import functools

import jax
import jax.numpy as jnp
from jax import lax
from jax.experimental import pallas as pl
from jax.experimental.pallas import tpu as pltpu


# ---------------------------------------------------------------------------
# Shared finalize math: projection head + SupCon + Student's-t cluster KL.
#   embd0 : (B, H)  f32 mean-pooled view 0
#   e12   : (2B, H) f32 stacked mean-pooled views 1, 2
# Returns a (1, 2) f32 array: [contrastive_loss, cluster_kl_loss].
# ---------------------------------------------------------------------------
def _losses(embd0, e12, w1, b1, w2, b2, centers, *, temperature,
            base_temperature, batch):
    B = batch
    n = 2 * B
    H = embd0.shape[1]

    # ---- projection head: Linear -> ReLU -> Linear (bf16 MXU, f32 acc) -----
    h = jnp.dot(e12.astype(jnp.bfloat16), w1.astype(jnp.bfloat16),
                preferred_element_type=jnp.float32) + b1
    h = jnp.maximum(h, 0.0)
    z = jnp.dot(h.astype(jnp.bfloat16), w2.astype(jnp.bfloat16),
                preferred_element_type=jnp.float32) + b2
    # F.normalize(dim=1) via rsqrt (EUP path).
    f = z * lax.rsqrt(jnp.sum(z * z, axis=1, keepdims=True) + 1e-24)   # (2B,D)

    # ---- SupConLoss (unsupervised: mask = eye, contrast_mode='all') --------
    logits = lax.dot_general(
        f.astype(jnp.bfloat16), f.astype(jnp.bfloat16),
        (((1,), (1,)), ((), ())), preferred_element_type=jnp.float32,
    ) * jnp.float32(1.0 / temperature)                                 # (2B,2B)
    logits = logits - jnp.max(logits, axis=1, keepdims=True)
    row = lax.broadcasted_iota(jnp.int32, (n, n), 0)
    col = lax.broadcasted_iota(jnp.int32, (n, n), 1)
    not_diag = (row != col).astype(jnp.float32)                        # logits_mask
    pos = ((col == row + B) | (col == row - B)).astype(jnp.float32)
    exp_logits = jnp.exp(logits) * not_diag
    log_prob = logits - jnp.log(jnp.sum(exp_logits, axis=1, keepdims=True))
    # mask.sum(1) == 1 for the unsupervised eye mask, so the mean over
    # positives is just the masked sum.
    mean_log_prob_pos = jnp.sum(pos * log_prob, axis=1, keepdims=True)
    con = jnp.sum(mean_log_prob_pos, axis=0, keepdims=True) * jnp.float32(
        -(temperature / base_temperature) / n)                         # (1, 1)

    # ---- cluster prob (Student's-t, alpha=1) + target + KL(sum)/B ----------
    c = centers.astype(jnp.float32)                                    # (K, H)
    # d2 = ||e||^2 + ||c||^2 - 2 e.c^T.  Cross term stays f32 on the MXU to
    # avoid bf16 cancellation when embeddings are near centers; clamp at 0.
    cross = lax.dot_general(embd0, c, (((1,), (1,)), ((), ())),
                            preferred_element_type=jnp.float32)        # (B, K)
    e_sq = jnp.sum(embd0 * embd0, axis=1, keepdims=True)               # (B, 1)
    # ||c||^2 as a (1, K) row via a tiny ones-matmul (keeps it lane-major).
    c_sq = lax.dot_general(jnp.ones((1, H), jnp.float32), c * c,
                           (((1,), (1,)), ((), ())),
                           preferred_element_type=jnp.float32)         # (1, K)
    d2 = jnp.maximum(e_sq + c_sq - 2.0 * cross, 0.0)                   # (B, K)

    # Exact divides on the tiny (B, K) tensors (they feed logs) -- no chained
    # approximate reciprocals.
    num = 1.0 / (1.0 + d2)                                             # alpha=1
    q = num / jnp.sum(num, axis=1, keepdims=True)
    # target_distribution(q) (treated as a detached constant).
    w = (q * q) / jnp.sum(q, axis=0, keepdims=True)
    p = w / jnp.sum(w, axis=1, keepdims=True)
    kl = p * (jnp.log(p + 1e-30) - jnp.log(q + 1e-8))                  # xlogy-safe
    kl_loss = jnp.sum(jnp.sum(kl, axis=1, keepdims=True), axis=0,
                      keepdims=True) * jnp.float32(1.0 / B)            # sum / B

    # Merge the two scalars into one lane-dense (1, 2) output block.
    lane = lax.broadcasted_iota(jnp.int32, (1, 2), 1)
    return jnp.where(lane == 0, con, kl_loss)


# ---------------------------------------------------------------------------
# Fast path: the whole (B, S, H) trio fits the VMEM budget -> grid=(1,),
# pool directly from the blocks (no accumulators, no init/when machinery).
# ---------------------------------------------------------------------------
def _single_pass_kernel(x0_ref, x1_ref, x2_ref, w1_ref, b1_ref, w2_ref,
                        b2_ref, c_ref, out_ref, *, seq_len, batch,
                        temperature, base_temperature):
    inv_s = jnp.float32(1.0 / seq_len)
    embd0 = jnp.sum(x0_ref[...].astype(jnp.float32), axis=1) * inv_s   # (B, H)
    e1 = jnp.sum(x1_ref[...].astype(jnp.float32), axis=1) * inv_s
    e2 = jnp.sum(x2_ref[...].astype(jnp.float32), axis=1) * inv_s
    e12 = jnp.concatenate([e1, e2], axis=0)                            # (2B, H)
    out_ref[...] = _losses(embd0, e12, w1_ref[...], b1_ref[...], w2_ref[...],
                           b2_ref[...], c_ref[...],
                           temperature=temperature,
                           base_temperature=base_temperature, batch=batch)


# ---------------------------------------------------------------------------
# Streaming path: grid = (S // seq_tile,) over the sequence ("arbitrary"),
# three full-ref f32 accumulators (unmasked stores, no B%8 dependency).
# ---------------------------------------------------------------------------
def _streaming_kernel(x0_ref, x1_ref, x2_ref, w1_ref, b1_ref, w2_ref, b2_ref,
                      c_ref, out_ref, acc0_ref, acc1_ref, acc2_ref, *,
                      seq_len, batch, temperature, base_temperature):
    s = pl.program_id(0)
    ns = pl.num_programs(0)

    @pl.when(s == 0)
    def _init():
        acc0_ref[...] = jnp.zeros_like(acc0_ref)
        acc1_ref[...] = jnp.zeros_like(acc1_ref)
        acc2_ref[...] = jnp.zeros_like(acc2_ref)

    # Sequence-chunk partial sums, accumulated in f32 (bf16-input safe).
    acc0_ref[...] += jnp.sum(x0_ref[...].astype(jnp.float32), axis=1)
    acc1_ref[...] += jnp.sum(x1_ref[...].astype(jnp.float32), axis=1)
    acc2_ref[...] += jnp.sum(x2_ref[...].astype(jnp.float32), axis=1)

    @pl.when(s == ns - 1)
    def _finalize():
        inv_s = jnp.float32(1.0 / seq_len)
        embd0 = acc0_ref[...] * inv_s                                  # (B, H)
        e12 = jnp.concatenate([acc1_ref[...], acc2_ref[...]], axis=0) * inv_s
        out_ref[...] = _losses(embd0, e12, w1_ref[...], b1_ref[...],
                               w2_ref[...], b2_ref[...], c_ref[...],
                               temperature=temperature,
                               base_temperature=base_temperature, batch=batch)


# ---------------------------------------------------------------------------
# Tile selection from a generation-aware VMEM budget
# ---------------------------------------------------------------------------
def _vmem_capacity_bytes():
    try:
        cap = int(getattr(pltpu.get_tpu_info(), "vmem_capacity_bytes", 0))
        if cap > 0:
            return cap
    except Exception:
        pass
    return 64 * 1024 * 1024          # conservative (v7x per-TC) fallback


def _pick_seq_tile(B, S, H, itemsize, fixed_bytes, budget_bytes):
    # Sublane packing of the input dtype: 8 rows for f32, 16 for bf16.
    pack = 8 * max(1, 4 // itemsize)

    def stream_bytes(tile):
        # 3 input streams x 2 pipeline buffers.
        return 3 * 2 * B * tile * H * itemsize

    if stream_bytes(S) + fixed_bytes <= budget_bytes:
        return S                                     # whole trio fits: grid=(1,)
    for d in range(S, 0, -1):                        # largest divisor that fits
        if S % d == 0 and d % pack == 0 and \
                stream_bytes(d) + fixed_bytes <= budget_bytes:
            return d
    return S                                         # fallback: single block


# ---------------------------------------------------------------------------
# ClusterLearner.forward (use_perturbation=False) -- one pallas_call
# ---------------------------------------------------------------------------
def cluster_learner_forward(inputs, params, temperature, base_temperature,
                            *, seq_tile=None):
    x0, x1, x2 = inputs
    B, S, H = x0.shape
    itemsize = x0.dtype.itemsize
    D = params["w2"].shape[1]
    K = params["cluster_centers"].shape[0]

    param_bytes = sum(int(p.size) * p.dtype.itemsize for p in params.values())
    # Double-buffered params + f32 accumulators + finalize-temporary margin.
    fixed_bytes = 2 * param_bytes + 3 * B * H * 4 + (4 << 20)

    vmem_cap = _vmem_capacity_bytes()
    budget = int(vmem_cap * 0.75)      # ~48 MiB on v7x, ~96 MiB on v5e/v6e

    if seq_tile is None:
        seq_tile = _pick_seq_tile(B, S, H, itemsize, fixed_bytes, budget)
    assert S % seq_tile == 0, "seq_tile must divide S"
    if seq_tile < S:
        pack = 8 * max(1, 4 // itemsize)
        assert seq_tile % pack == 0, (
            f"seq_tile must be a multiple of {pack} for dtype {x0.dtype}")

    stream_bytes = 3 * 2 * B * seq_tile * H * itemsize
    vmem_limit = int(min(vmem_cap, max(32 << 20, stream_bytes + fixed_bytes)))

    kern_kwargs = dict(seq_len=S, batch=B, temperature=float(temperature),
                       base_temperature=float(base_temperature))

    def full_spec(a):
        # Whole-array block, constant block index -> DMA'd once, kept resident.
        nd = a.ndim
        return pl.BlockSpec(a.shape, lambda s, _nd=nd: (0,) * _nd)

    param_args = (params["w1"], params["b1"], params["w2"], params["b2"],
                  params["cluster_centers"])
    param_specs = [full_spec(a) for a in param_args]
    out_spec = pl.BlockSpec((1, 2), lambda s: (0, 0))

    if seq_tile == S:
        kernel = functools.partial(_single_pass_kernel, **kern_kwargs)
        grid = (1,)
        x_spec = pl.BlockSpec((B, S, H), lambda s: (0, 0, 0))
        scratch = []
    else:
        kernel = functools.partial(_streaming_kernel, **kern_kwargs)
        grid = (S // seq_tile,)
        x_spec = pl.BlockSpec((B, seq_tile, H), lambda s: (0, s, 0))
        scratch = [pltpu.VMEM((B, H), jnp.float32),
                   pltpu.VMEM((B, H), jnp.float32),
                   pltpu.VMEM((B, H), jnp.float32)]

    n = 2 * B
    cost = pl.CostEstimate(
        flops=int(2 * n * H * H + 2 * n * H * D + 2 * n * n * D
                  + 2 * B * K * H + 3 * B * S * H),
        transcendentals=int(n * n + 4 * B * K + n),
        bytes_accessed=int(3 * B * S * H * itemsize + param_bytes + 8),
    )

    out = pl.pallas_call(
        kernel,
        out_shape=jax.ShapeDtypeStruct((1, 2), jnp.float32),
        grid_spec=pltpu.PrefetchScalarGridSpec(
            num_scalar_prefetch=0,
            grid=grid,
            in_specs=[x_spec, x_spec, x_spec] + param_specs,
            out_specs=out_spec,
            scratch_shapes=scratch,
        ),
        compiler_params=pltpu.CompilerParams(
            # Sequence axis is a reduction into VMEM scratch -> "arbitrary".
            dimension_semantics=("arbitrary",),
            vmem_limit_bytes=vmem_limit,
        ),
        cost_estimate=cost,
    )(x0, x1, x2, *param_args)

    contrastive_loss = out[0, 0]
    cluster_loss = out[0, 1]
    loss = contrastive_loss + cluster_loss       # use_perturbation=False path
    return {
        "Instance-CL_loss": contrastive_loss,
        "clustering_loss": cluster_loss,
        "local_consistency_loss": 0.0,
        "loss": loss,
    }


# ---------------------------------------------------------------------------
# Pure-JAX f32 reference (semantic check against the PyTorch module)
# ---------------------------------------------------------------------------
def _reference(inputs, params, temperature, base_temperature):
    x0, x1, x2 = inputs

    def pool(x):
        return jnp.mean(x.astype(jnp.float32), axis=1)

    def head(e):
        h = jnp.maximum(e @ params["w1"] + params["b1"], 0.0)
        z = h @ params["w2"] + params["b2"]
        return z / jnp.maximum(jnp.linalg.norm(z, axis=1, keepdims=True), 1e-12)

    embd0 = pool(x0)
    f = jnp.concatenate([head(pool(x1)), head(pool(x2))], axis=0)
    n = f.shape[0]
    b = n // 2
    logits = (f @ f.T) / temperature
    logits = logits - logits.max(axis=1, keepdims=True)
    not_diag = 1.0 - jnp.eye(n)
    pos = jnp.eye(n, k=b) + jnp.eye(n, k=-b)
    exp_logits = jnp.exp(logits) * not_diag
    log_prob = logits - jnp.log(exp_logits.sum(1, keepdims=True))
    mlp = (pos * log_prob).sum(1) / pos.sum(1)
    con = -(temperature / base_temperature) * mlp.mean()

    c = params["cluster_centers"]
    d2 = jnp.sum((embd0[:, None, :] - c[None, :, :]) ** 2, axis=2)
    num = 1.0 / (1.0 + d2)
    q = num / num.sum(1, keepdims=True)
    w = (q ** 2) / q.sum(0, keepdims=True)
    p = w / w.sum(1, keepdims=True)
    kl = jnp.sum(p * (jnp.log(p) - jnp.log(q + 1e-8))) / q.shape[0]
    return con, kl


if __name__ == "__main__":
    # Small but lane-dense shapes (H = D = 128).
    B, S, H, D, K = 8, 32, 128, 128, 8
    temperature, base_temperature = 0.5, 0.07

    key = jax.random.PRNGKey(0)
    ks = jax.random.split(key, 8)
    x0_f = jax.random.normal(ks[0], (B, S, H), jnp.float32)
    # two augmented "views"
    x1_f = x0_f + 0.05 * jax.random.normal(ks[1], (B, S, H), jnp.float32)
    x2_f = x0_f + 0.05 * jax.random.normal(ks[2], (B, S, H), jnp.float32)
    # Stream the token features as bf16 (halves the dominant HBM traffic);
    # the kernel accumulates the mean pool in f32.
    x0 = x0_f.astype(jnp.bfloat16)
    x1 = x1_f.astype(jnp.bfloat16)
    x2 = x2_f.astype(jnp.bfloat16)

    params = {
        "w1": jax.random.normal(ks[3], (H, H), jnp.float32) / jnp.sqrt(H),
        "b1": 0.1 * jax.random.normal(ks[6], (1, H), jnp.float32),
        "w2": jax.random.normal(ks[4], (H, D), jnp.float32) / jnp.sqrt(H),
        "b2": 0.1 * jax.random.normal(ks[7], (1, D), jnp.float32),
        "cluster_centers": jax.random.normal(ks[5], (K, H), jnp.float32),
    }

    ref_con, ref_kl = _reference((x0, x1, x2), params, temperature,
                                 base_temperature)

    def close(a, b, atol=1e-2, rtol=2e-2):
        a = float(a); b = float(b)
        return abs(a - b) <= atol + rtol * abs(b)

    # Path 1: auto tile selection (whole trio fits VMEM -> grid=(1,) fast path).
    out1 = cluster_learner_forward((x0, x1, x2), params, temperature,
                                   base_temperature)
    jax.block_until_ready(out1["loss"])
    assert close(out1["Instance-CL_loss"], ref_con), (
        float(out1["Instance-CL_loss"]), float(ref_con))
    assert close(out1["clustering_loss"], ref_kl), (
        float(out1["clustering_loss"]), float(ref_kl))

    # Path 2: forced seq_tile exercises the streaming (gridded) code path
    # used for large S; bf16 inputs -> tile must be a multiple of 16.
    out2 = cluster_learner_forward((x0, x1, x2), params, temperature,
                                   base_temperature, seq_tile=16)
    jax.block_until_ready(out2["loss"])
    assert close(out2["Instance-CL_loss"], ref_con), (
        float(out2["Instance-CL_loss"]), float(ref_con))
    assert close(out2["clustering_loss"], ref_kl), (
        float(out2["clustering_loss"]), float(ref_kl))

    print("KERNEL_OK")
</pallas_src>

<mosaic_0001>
module attributes {stable_mosaic.version = 11 : i64} {
  func.func @_single_pass_kernel(%arg0: i32, %arg1: memref<8x32x128xbf16, #tpu.memory_space<vmem>>, %arg2: memref<8x32x128xbf16, #tpu.memory_space<vmem>>, %arg3: memref<8x32x128xbf16, #tpu.memory_space<vmem>>, %arg4: memref<128x128xf32, #tpu.memory_space<vmem>>, %arg5: memref<1x128xf32, #tpu.memory_space<vmem>>, %arg6: memref<128x128xf32, #tpu.memory_space<vmem>>, %arg7: memref<1x128xf32, #tpu.memory_space<vmem>>, %arg8: memref<8x128xf32, #tpu.memory_space<vmem>>, %arg9: memref<1x2xf32, #tpu.memory_space<vmem>>) attributes {dimension_semantics = [#tpu.dimension_semantics<arbitrary>], iteration_bounds = array<i64: 1>, scalar_prefetch = 0 : i64, scratch_operands = 0 : i64, tpu.core_type = #tpu.core_type<tc>, window_params = [{pipeline_mode = #tpu.pipeline_mode<synchronous>, transform_indices = @transform_0, window_bounds = array<i64: 8, 32, 128>}, {pipeline_mode = #tpu.pipeline_mode<synchronous>, transform_indices = @transform_1, window_bounds = array<i64: 8, 32, 128>}, {pipeline_mode = #tpu.pipeline_mode<synchronous>, transform_indices = @transform_2, window_bounds = array<i64: 8, 32, 128>}, {pipeline_mode = #tpu.pipeline_mode<synchronous>, transform_indices = @transform_3, window_bounds = array<i64: 128, 128>}, {pipeline_mode = #tpu.pipeline_mode<synchronous>, transform_indices = @transform_4, window_bounds = array<i64: 1, 128>}, {pipeline_mode = #tpu.pipeline_mode<synchronous>, transform_indices = @transform_5, window_bounds = array<i64: 128, 128>}, {pipeline_mode = #tpu.pipeline_mode<synchronous>, transform_indices = @transform_6, window_bounds = array<i64: 1, 128>}, {pipeline_mode = #tpu.pipeline_mode<synchronous>, transform_indices = @transform_7, window_bounds = array<i64: 8, 128>}, {pipeline_mode = #tpu.pipeline_mode<synchronous>, transform_indices = @transform_8, window_bounds = array<i64: 1, 2>}]} {
    %c0 = arith.constant 0 : index
    %c0_0 = arith.constant 0 : index
    %c0_1 = arith.constant 0 : index
    %0 = vector.load %arg1[%c0, %c0_0, %c0_1] : memref<8x32x128xbf16, #tpu.memory_space<vmem>>, vector<8x32x128xbf16>
    %1 = arith.extf %0 : vector<8x32x128xbf16> to vector<8x32x128xf32>
    %cst = arith.constant dense<0.000000e+00> : vector<8x128xf32>
    %2 = vector.multi_reduction <add>, %1, %cst [1] : vector<8x32x128xf32> to vector<8x128xf32>
    %cst_2 = arith.constant 3.125000e-02 : f32
    %3 = vector.broadcast %cst_2 : f32 to vector<8x128xf32>
    %4 = arith.mulf %2, %3 : vector<8x128xf32>
    %c0_3 = arith.constant 0 : index
    %c0_4 = arith.constant 0 : index
    %c0_5 = arith.constant 0 : index
    %5 = vector.load %arg2[%c0_3, %c0_4, %c0_5] : memref<8x32x128xbf16, #tpu.memory_space<vmem>>, vector<8x32x128xbf16>
    %6 = arith.extf %5 : vector<8x32x128xbf16> to vector<8x32x128xf32>
    %cst_6 = arith.constant dense<0.000000e+00> : vector<8x128xf32>
    %7 = vector.multi_reduction <add>, %6, %cst_6 [1] : vector<8x32x128xf32> to vector<8x128xf32>
    %cst_7 = arith.constant 3.125000e-02 : f32
    %8 = vector.broadcast %cst_7 : f32 to vector<8x128xf32>
    %9 = arith.mulf %7, %8 : vector<8x128xf32>
    %c0_8 = arith.constant 0 : index
    %c0_9 = arith.constant 0 : index
    %c0_10 = arith.constant 0 : index
    %10 = vector.load %arg3[%c0_8, %c0_9, %c0_10] : memref<8x32x128xbf16, #tpu.memory_space<vmem>>, vector<8x32x128xbf16>
    %11 = arith.extf %10 : vector<8x32x128xbf16> to vector<8x32x128xf32>
    %cst_11 = arith.constant dense<0.000000e+00> : vector<8x128xf32>
    %12 = vector.multi_reduction <add>, %11, %cst_11 [1] : vector<8x32x128xf32> to vector<8x128xf32>
    %cst_12 = arith.constant 3.125000e-02 : f32
    %13 = vector.broadcast %cst_12 : f32 to vector<8x128xf32>
    %14 = arith.mulf %12, %13 : vector<8x128xf32>
    %15 = tpu.concatenate %9, %14 in 0 : vector<8x128xf32>, vector<8x128xf32> -> vector<16x128xf32>
    %c0_13 = arith.constant 0 : index
    %c0_14 = arith.constant 0 : index
    %16 = vector.load %arg4[%c0_13, %c0_14] : memref<128x128xf32, #tpu.memory_space<vmem>>, vector<128x128xf32>
    %c0_15 = arith.constant 0 : index
    %c0_16 = arith.constant 0 : index
    %17 = vector.load %arg5[%c0_15, %c0_16] : memref<1x128xf32, #tpu.memory_space<vmem>>, vector<1x128xf32>
    %c0_17 = arith.constant 0 : index
    %c0_18 = arith.constant 0 : index
    %18 = vector.load %arg6[%c0_17, %c0_18] : memref<128x128xf32, #tpu.memory_space<vmem>>, vector<128x128xf32>
    %c0_19 = arith.constant 0 : index
    %c0_20 = arith.constant 0 : index
    %19 = vector.load %arg7[%c0_19, %c0_20] : memref<1x128xf32, #tpu.memory_space<vmem>>, vector<1x128xf32>
    %c0_21 = arith.constant 0 : index
    %c0_22 = arith.constant 0 : index
    %20 = vector.load %arg8[%c0_21, %c0_22] : memref<8x128xf32, #tpu.memory_space<vmem>>, vector<8x128xf32>
    %21 = arith.truncf %15 : vector<16x128xf32> to vector<16x128xbf16>
    %22 = arith.truncf %16 : vector<128x128xf32> to vector<128x128xbf16>
    %cst_23 = arith.constant dense<0.000000e+00> : vector<16x128xf32>
    %23 = tpu.matmul %21, %22, %cst_23 {dimension_numbers = #tpu.dot_dimension_numbers<[1], [0], [0], [1], [0, 0, 1, 1], [], []>} : vector<16x128xbf16>, vector<128x128xbf16>, vector<16x128xf32> -> vector<16x128xf32>
    %24 = vector.broadcast %17 : vector<1x128xf32> to vector<16x128xf32>
    %25 = arith.addf %23, %24 : vector<16x128xf32>
    %cst_24 = arith.constant 0.000000e+00 : f32
    %26 = vector.broadcast %cst_24 : f32 to vector<16x128xf32>
    %27 = arith.maximumf %25, %26 : vector<16x128xf32>
    %28 = arith.truncf %27 : vector<16x128xf32> to vector<16x128xbf16>
    %29 = arith.truncf %18 : vector<128x128xf32> to vector<128x128xbf16>
    %cst_25 = arith.constant dense<0.000000e+00> : vector<16x128xf32>
    %30 = tpu.matmul %28, %29, %cst_25 {dimension_numbers = #tpu.dot_dimension_numbers<[1], [0], [0], [1], [0, 0, 1, 1], [], []>} : vector<16x128xbf16>, vector<128x128xbf16>, vector<16x128xf32> -> vector<16x128xf32>
    %31 = vector.broadcast %19 : vector<1x128xf32> to vector<16x128xf32>
    %32 = arith.addf %30, %31 : vector<16x128xf32>
    %33 = arith.mulf %32, %32 : vector<16x128xf32>
    %cst_26 = arith.constant dense<0.000000e+00> : vector<16xf32>
    %34 = vector.multi_reduction <add>, %33, %cst_26 [1] : vector<16x128xf32> to vector<16xf32>
    %35 = vector.shape_cast %34 : vector<16xf32> to vector<16x1xf32>
    %cst_27 = arith.constant 1.000000e-24 : f32
    %36 = vector.broadcast %cst_27 : f32 to vector<16x1xf32>
    %37 = arith.addf %35, %36 : vector<16x1xf32>
    %38 = math.rsqrt %37 : vector<16x1xf32>
    %39 = vector.broadcast %38 : vector<16x1xf32> to vector<16x128xf32>
    %40 = arith.mulf %32, %39 : vector<16x128xf32>
    %41 = arith.truncf %40 : vector<16x128xf32> to vector<16x128xbf16>
    %42 = arith.truncf %40 : vector<16x128xf32> to vector<16x128xbf16>
    %cst_28 = arith.constant dense<0.000000e+00> : vector<16x16xf32>
    %43 = tpu.matmul %41, %42, %cst_28 {dimension_numbers = #tpu.dot_dimension_numbers<[1], [1], [0], [0], [0, 0, 1, 0], [], []>} : vector<16x128xbf16>, vector<16x128xbf16>, vector<16x16xf32> -> vector<16x16xf32>
    %cst_29 = arith.constant 2.000000e+00 : f32
    %44 = vector.broadcast %cst_29 : f32 to vector<16x16xf32>
    %45 = arith.mulf %43, %44 : vector<16x16xf32>
    %cst_30 = arith.constant dense<0xFF800000> : vector<16xf32>
    %46 = vector.multi_reduction <maximumf>, %45, %cst_30 [1] : vector<16x16xf32> to vector<16xf32>
    %47 = vector.shape_cast %46 : vector<16xf32> to vector<16x1xf32>
    %48 = vector.broadcast %47 : vector<16x1xf32> to vector<16x16xf32>
    %49 = arith.subf %45, %48 : vector<16x16xf32>
    %50 = tpu.iota {dimensions = array<i32: 0>} : vector<16x16xi32>
    %51 = tpu.iota {dimensions = array<i32: 1>} : vector<16x16xi32>
    %52 = arith.cmpi ne, %50, %51 : vector<16x16xi32>
    %53 = arith.extui %52 : vector<16x16xi1> to vector<16x16xi32>
    %54 = arith.sitofp %53 : vector<16x16xi32> to vector<16x16xf32>
    %c8_i32 = arith.constant 8 : i32
    %55 = vector.broadcast %c8_i32 : i32 to vector<16x16xi32>
    %56 = arith.addi %50, %55 : vector<16x16xi32>
    %57 = arith.cmpi eq, %51, %56 : vector<16x16xi32>
    %c8_i32_31 = arith.constant 8 : i32
    %58 = vector.broadcast %c8_i32_31 : i32 to vector<16x16xi32>
    %59 = arith.subi %50, %58 : vector<16x16xi32>
    %60 = arith.cmpi eq, %51, %59 : vector<16x16xi32>
    %61 = arith.ori %57, %60 : vector<16x16xi1>
    %62 = arith.extui %61 : vector<16x16xi1> to vector<16x16xi32>
    %63 = arith.sitofp %62 : vector<16x16xi32> to vector<16x16xf32>
    %64 = math.exp %49 : vector<16x16xf32>
    %65 = arith.mulf %64, %54 : vector<16x16xf32>
    %cst_32 = arith.constant dense<0.000000e+00> : vector<16xf32>
    %66 = vector.multi_reduction <add>, %65, %cst_32 [1] : vector<16x16xf32> to vector<16xf32>
    %67 = vector.shape_cast %66 : vector<16xf32> to vector<16x1xf32>
    %68 = math.log %67 : vector<16x1xf32>
    %69 = vector.broadcast %68 : vector<16x1xf32> to vector<16x16xf32>
    %70 = arith.subf %49, %69 : vector<16x16xf32>
    %71 = arith.mulf %63, %70 : vector<16x16xf32>
    %cst_33 = arith.constant dense<0.000000e+00> : vector<16xf32>
    %72 = vector.multi_reduction <add>, %71, %cst_33 [1] : vector<16x16xf32> to vector<16xf32>
    %73 = vector.shape_cast %72 : vector<16xf32> to vector<16x1xf32>
    %cst_34 = arith.constant dense<0.000000e+00> : vector<1xf32>
    %74 = vector.multi_reduction <add>, %73, %cst_34 [0] : vector<16x1xf32> to vector<1xf32>
    %75 = vector.shape_cast %74 : vector<1xf32> to vector<1x1xf32>
    %cst_35 = arith.constant -0.446428567 : f32
    %76 = vector.broadcast %cst_35 : f32 to vector<1x1xf32>
    %77 = arith.mulf %75, %76 : vector<1x1xf32>
    %cst_36 = arith.constant dense<0.000000e+00> : vector<8x8xf32>
    %78 = tpu.matmul %4, %20, %cst_36 {dimension_numbers = #tpu.dot_dimension_numbers<[1], [1], [0], [0], [0, 0, 1, 0], [], []>} : vector<8x128xf32>, vector<8x128xf32>, vector<8x8xf32> -> vector<8x8xf32>
    %79 = arith.mulf %4, %4 : vector<8x128xf32>
    %cst_37 = arith.constant dense<0.000000e+00> : vector<8xf32>
    %80 = vector.multi_reduction <add>, %79, %cst_37 [1] : vector<8x128xf32> to vector<8xf32>
    %81 = vector.shape_cast %80 : vector<8xf32> to vector<8x1xf32>
    %cst_38 = arith.constant 1.000000e+00 : f32
    %82 = vector.broadcast %cst_38 : f32 to vector<1x128xf32>
    %83 = arith.mulf %20, %20 : vector<8x128xf32>
    %cst_39 = arith.constant dense<0.000000e+00> : vector<1x8xf32>
    %84 = tpu.matmul %82, %83, %cst_39 {dimension_numbers = #tpu.dot_dimension_numbers<[1], [1], [0], [0], [0, 0, 1, 0], [], []>} : vector<1x128xf32>, vector<8x128xf32>, vector<1x8xf32> -> vector<1x8xf32>
    %85 = vector.broadcast %81 : vector<8x1xf32> to vector<8x8xf32>
    %86 = vector.broadcast %84 : vector<1x8xf32> to vector<8x8xf32>
    %87 = arith.addf %85, %86 : vector<8x8xf32>
    %cst_40 = arith.constant 2.000000e+00 : f32
    %88 = vector.broadcast %cst_40 : f32 to vector<8x8xf32>
    %89 = arith.mulf %88, %78 : vector<8x8xf32>
    %90 = arith.subf %87, %89 : vector<8x8xf32>
    %cst_41 = arith.constant 0.000000e+00 : f32
    %91 = vector.broadcast %cst_41 : f32 to vector<8x8xf32>
    %92 = arith.maximumf %90, %91 : vector<8x8xf32>
    %cst_42 = arith.constant 1.000000e+00 : f32
    %93 = vector.broadcast %cst_42 : f32 to vector<8x8xf32>
    %94 = arith.addf %93, %92 : vector<8x8xf32>
    %cst_43 = arith.constant 1.000000e+00 : f32
    %95 = vector.broadcast %cst_43 : f32 to vector<8x8xf32>
    %96 = arith.divf %95, %94 : vector<8x8xf32>
    %cst_44 = arith.constant dense<0.000000e+00> : vector<8xf32>
    %97 = vector.multi_reduction <add>, %96, %cst_44 [1] : vector<8x8xf32> to vector<8xf32>
    %98 = vector.shape_cast %97 : vector<8xf32> to vector<8x1xf32>
    %99 = vector.broadcast %98 : vector<8x1xf32> to vector<8x8xf32>
    %100 = arith.divf %96, %99 : vector<8x8xf32>
    %101 = arith.mulf %100, %100 : vector<8x8xf32>
    %cst_45 = arith.constant dense<0.000000e+00> : vector<8xf32>
    %102 = vector.multi_reduction <add>, %100, %cst_45 [0] : vector<8x8xf32> to vector<8xf32>
    %103 = vector.shape_cast %102 : vector<8xf32> to vector<1x8xf32>
    %104 = vector.broadcast %103 : vector<1x8xf32> to vector<8x8xf32>
    %105 = arith.divf %101, %104 : vector<8x8xf32>
    %cst_46 = arith.constant dense<0.000000e+00> : vector<8xf32>
    %106 = vector.multi_reduction <add>, %105, %cst_46 [1] : vector<8x8xf32> to vector<8xf32>
    %107 = vector.shape_cast %106 : vector<8xf32> to vector<8x1xf32>
    %108 = vector.broadcast %107 : vector<8x1xf32> to vector<8x8xf32>
    %109 = arith.divf %105, %108 : vector<8x8xf32>
    %cst_47 = arith.constant 1.000000e-30 : f32
    %110 = vector.broadcast %cst_47 : f32 to vector<8x8xf32>
    %111 = arith.addf %109, %110 : vector<8x8xf32>
    %112 = math.log %111 : vector<8x8xf32>
    %cst_48 = arith.constant 9.99999993E-9 : f32
    %113 = vector.broadcast %cst_48 : f32 to vector<8x8xf32>
    %114 = arith.addf %100, %113 : vector<8x8xf32>
    %115 = math.log %114 : vector<8x8xf32>
    %116 = arith.subf %112, %115 : vector<8x8xf32>
    %117 = arith.mulf %109, %116 : vector<8x8xf32>
    %cst_49 = arith.constant dense<0.000000e+00> : vector<8xf32>
    %118 = vector.multi_reduction <add>, %117, %cst_49 [1] : vector<8x8xf32> to vector<8xf32>
    %119 = vector.shape_cast %118 : vector<8xf32> to vector<8x1xf32>
    %cst_50 = arith.constant dense<0.000000e+00> : vector<1xf32>
    %120 = vector.multi_reduction <add>, %119, %cst_50 [0] : vector<8x1xf32> to vector<1xf32>
    %121 = vector.shape_cast %120 : vector<1xf32> to vector<1x1xf32>
    %cst_51 = arith.constant 1.250000e-01 : f32
    %122 = vector.broadcast %cst_51 : f32 to vector<1x1xf32>
    %123 = arith.mulf %121, %122 : vector<1x1xf32>
    %124 = tpu.iota {dimensions = array<i32: 1>} : vector<1x2xi32>
    %c0_i32 = arith.constant 0 : i32
    %125 = vector.broadcast %c0_i32 : i32 to vector<1x2xi32>
    %126 = arith.cmpi eq, %124, %125 : vector<1x2xi32>
    %127 = vector.shape_cast %77 : vector<1x1xf32> to vector<1x1xf32>
    %128 = vector.broadcast %127 : vector<1x1xf32> to vector<1x2xf32>
    %129 = vector.shape_cast %123 : vector<1x1xf32> to vector<1x1xf32>
    %130 = vector.broadcast %129 : vector<1x1xf32> to vector<1x2xf32>
    %131 = arith.select %126, %128, %130 : vector<1x2xi1>, vector<1x2xf32>
    %c0_52 = arith.constant 0 : index
    %c0_53 = arith.constant 0 : index
    %132 = vector.load %arg9[%c0_52, %c0_53] : memref<1x2xf32, #tpu.memory_space<vmem>>, vector<1x2xf32>
    tpu.vector_store %arg9[%c0_52, %c0_53], %131 {strides = array<i32>} : memref<1x2xf32, #tpu.memory_space<vmem>>, vector<1x2xf32>,
    return
  }
  func.func @transform_0(%arg0: i32) -> (i32, i32, i32) {
    %c0_i32 = arith.constant 0 : i32
    %c0_i32_0 = arith.constant 0 : i32
    %c0_i32_1 = arith.constant 0 : i32
    %c0_i32_2 = arith.constant 0 : i32
    return %c0_i32, %c0_i32_0, %c0_i32_1 : i32, i32, i32
  }
  func.func @transform_1(%arg0: i32) -> (i32, i32, i32) {
    %c0_i32 = arith.constant 0 : i32
    %c0_i32_0 = arith.constant 0 : i32
    %c0_i32_1 = arith.constant 0 : i32
    %c0_i32_2 = arith.constant 0 : i32
    return %c0_i32, %c0_i32_0, %c0_i32_1 : i32, i32, i32
  }
  func.func @transform_2(%arg0: i32) -> (i32, i32, i32) {
    %c0_i32 = arith.constant 0 : i32
    %c0_i32_0 = arith.constant 0 : i32
    %c0_i32_1 = arith.constant 0 : i32
    %c0_i32_2 = arith.constant 0 : i32
    return %c0_i32, %c0_i32_0, %c0_i32_1 : i32, i32, i32
  }
  func.func @transform_3(%arg0: i32) -> (i32, i32) {
    %c0_i32 = arith.constant 0 : i32
    %c0_i32_0 = arith.constant 0 : i32
    %c0_i32_1 = arith.constant 0 : i32
    return %c0_i32, %c0_i32_0 : i32, i32
  }
  func.func @transform_4(%arg0: i32) -> (i32, i32) {
    %c0_i32 = arith.constant 0 : i32
    %c0_i32_0 = arith.constant 0 : i32
    %c0_i32_1 = arith.constant 0 : i32
    return %c0_i32, %c0_i32_0 : i32, i32
  }
  func.func @transform_5(%arg0: i32) -> (i32, i32) {
    %c0_i32 = arith.constant 0 : i32
    %c0_i32_0 = arith.constant 0 : i32
    %c0_i32_1 = arith.constant 0 : i32
    return %c0_i32, %c0_i32_0 : i32, i32
  }
  func.func @transform_6(%arg0: i32) -> (i32, i32) {
    %c0_i32 = arith.constant 0 : i32
    %c0_i32_0 = arith.constant 0 : i32
    %c0_i32_1 = arith.constant 0 : i32
    return %c0_i32, %c0_i32_0 : i32, i32
  }
  func.func @transform_7(%arg0: i32) -> (i32, i32) {
    %c0_i32 = arith.constant 0 : i32
    %c0_i32_0 = arith.constant 0 : i32
    %c0_i32_1 = arith.constant 0 : i32
    return %c0_i32, %c0_i32_0 : i32, i32
  }
  func.func @transform_8(%arg0: i32) -> (i32, i32) {
    %c0_i32 = arith.constant 0 : i32
    %c0_i32_0 = arith.constant 0 : i32
    %c0_i32_1 = arith.constant 0 : i32
    return %c0_i32, %c0_i32_0 : i32, i32
  }
}

</mosaic_0001>

<llo_original>
// kernel: tpu_custom_call.1
$region0: #{tpu_custom_call.1}
  #allocation0 [shape = 'u32[]', space=smem, size = 0x4, offset = 0x4, fixed_abs, tag = 'smem constant byte address 0x4 - core index']
  #allocation1 [shape = 'u32[144,128]{1,0:T(1,128)}', space=vmem, size = 0x12000, scoped, tag = 'internal scratch']
  %s0 = inlined_call_operand.hbm [shape: bf16[8,32,128], index: 0, kind: input, shape index: {}]
  %s1 = inlined_call_operand.hbm [shape: bf16[8,32,128], index: 1, kind: input, shape index: {}]
  %s2 = inlined_call_operand.hbm [shape: bf16[8,32,128], index: 2, kind: input, shape index: {}]
  %s3 = inlined_call_operand.hbm [shape: f32[128,128], index: 3, kind: input, shape index: {}]
  %s4 = inlined_call_operand.vmem [shape: f32[1,128], index: 4, kind: input, shape index: {}]
  %s5 = inlined_call_operand.hbm [shape: f32[128,128], index: 5, kind: input, shape index: {}]
  %s6 = inlined_call_operand.vmem [shape: f32[1,128], index: 6, kind: input, shape index: {}]
  %s7 = inlined_call_operand.vmem [shape: f32[8,128], index: 7, kind: input, shape index: {}]
  %s8 = inlined_call_operand.hbm [shape: f32[1,2], index: 8, kind: output, shape index: {}]
  %s9 = sld [smem:[#allocation0]]
  $region62: #{tpu_custom_call.1} parent=0
    _
  %s11 = ssub.s32 1, %s9
  %s12 = scalar_select 0, %s11, %s9
  $region1: #{tpu_custom_call.1} parent=0
    #allocation2 [shape = 'u8[65536]{0}', space=vmem, size = 0x10000, scoped, tag = 'input window, operand 0, single buffered']
    #allocation3 [shape = 's32[1]{0}', space=sflag, size = 0x4, scoped, tag = 'scoped memory for tpu_custom_call.1']
    #allocation4 [shape = 's32[1]{0}', space=sflag, size = 0x4, scoped, tag = 'scoped memory for tpu_custom_call.1']
    #allocation5 [shape = 'u8[65536]{0}', space=vmem, size = 0x10000, scoped, tag = 'input window, operand 1, single buffered']
    #allocation6 [shape = 's32[1]{0}', space=sflag, size = 0x4, scoped, tag = 'scoped memory for tpu_custom_call.1']
    #allocation7 [shape = 'u8[65536]{0}', space=vmem, size = 0x10000, scoped, tag = 'input window, operand 2, single buffered']
    #allocation8 [shape = 'u8[65536]{0}', space=vmem, size = 0x10000, scoped, tag = 'input window, operand 3, single buffered']
    #allocation9 [shape = 's32[1]{0}', space=sflag, size = 0x4, scoped, tag = 'scoped memory for tpu_custom_call.1']
    #allocation10 [shape = 'u8[65536]{0}', space=vmem, size = 0x10000, scoped, tag = 'input window, operand 5, single buffered']
    #allocation11 [shape = 'u8[512]{0}', space=vmem, size = 0x400, scoped, tag = 'output window, operand 0, single buffered']
    %13 = vsyncpa [#allocation3], 0
    %14 = vsyncpa [#allocation6], 0
    %15 = vsyncpa [#allocation9], 0
    %16 = vsyncpa [#allocation4], 0
    // Predicated region
    $region2: #{tpu_custom_call.1} parent=1 // pred_check
      _
    $region3: #{tpu_custom_call.1} parent=1 // pred_check_branch
      %18 = sbr.rel (0) target = $region5
    $region4: #{tpu_custom_call.1} parent=1 // pred_region
      %s20 = ssub.s32 2048, 2048
      %21 = vsyncadd [#allocation3], %s20
      %s22 = sshll.u32 [#allocation2], 4
      %s23 = int_to_ptr.vmem [resolvable:$true] %s22
      %28 = dma.hbm_to_vmem [thread:$0]  %s0, 2048, %s23, [#allocation3], 64, 64, 4
    $region5: #{tpu_custom_call.1} parent=1 // pred_fallthru
      _
    // Predicated region
    $region6: #{tpu_custom_call.1} parent=1 // pred_check
      _
    $region7: #{tpu_custom_call.1} parent=1 // pred_check_branch
      %30 = sbr.rel (0) target = $region9
    $region8: #{tpu_custom_call.1} parent=1 // pred_region
      %s32 = ssub.s32 2048, 2048
      %33 = vsyncadd [#allocation6], %s32
      %s34 = sshll.u32 [#allocation5], 4
      %s35 = int_to_ptr.vmem [resolvable:$true] %s34
      %40 = dma.hbm_to_vmem [thread:$0]  %s1, 2048, %s35, [#allocation6], 64, 64, 4
    $region9: #{tpu_custom_call.1} parent=1 // pred_fallthru
      _
    // Predicated region
    $region10: #{tpu_custom_call.1} parent=1 // pred_check
      _
    $region11: #{tpu_custom_call.1} parent=1 // pred_check_branch
      %42 = sbr.rel (0) target = $region13
    $region12: #{tpu_custom_call.1} parent=1 // pred_region
      %s44 = ssub.s32 2048, 2048
      %45 = vsyncadd [#allocation6], %s44
      %s46 = sshll.u32 [#allocation7], 4
      %s47 = int_to_ptr.vmem [resolvable:$true] %s46
      %52 = dma.hbm_to_vmem [thread:$0]  %s2, 2048, %s47, [#allocation6], 64, 64, 4
    $region13: #{tpu_custom_call.1} parent=1 // pred_fallthru
      _
    // Predicated region
    $region14: #{tpu_custom_call.1} parent=1 // pred_check
      _
    $region15: #{tpu_custom_call.1} parent=1 // pred_check_branch
      %54 = sbr.rel (0) target = $region17
    $region16: #{tpu_custom_call.1} parent=1 // pred_region
      %s56 = ssub.s32 2048, 2048
      %57 = vsyncadd [#allocation9], %s56
      %s58 = sshll.u32 [#allocation8], 4
      %s59 = int_to_ptr.vmem [resolvable:$true] %s58
      %64 = dma.hbm_to_vmem [thread:$0]  %s3, 2048, %s59, [#allocation9], 128, 128, 8
    $region17: #{tpu_custom_call.1} parent=1 // pred_fallthru
      _
    // Predicated region
    $region18: #{tpu_custom_call.1} parent=1 // pred_check
      _
    $region19: #{tpu_custom_call.1} parent=1 // pred_check_branch
      %66 = sbr.rel (0) target = $region21
    $region20: #{tpu_custom_call.1} parent=1 // pred_region
      _
    $region21: #{tpu_custom_call.1} parent=1 // pred_fallthru
      _
    // Predicated region
    $region22: #{tpu_custom_call.1} parent=1 // pred_check
      _
    $region23: #{tpu_custom_call.1} parent=1 // pred_check_branch
      %68 = sbr.rel (0) target = $region25
    $region24: #{tpu_custom_call.1} parent=1 // pred_region
      %s70 = ssub.s32 2048, 2048
      %71 = vsyncadd [#allocation9], %s70
      %s72 = sshll.u32 [#allocation10], 4
      %s73 = int_to_ptr.vmem [resolvable:$true] %s72
      %78 = dma.hbm_to_vmem [thread:$0]  %s5, 2048, %s73, [#allocation9], 128, 128, 8
    $region25: #{tpu_custom_call.1} parent=1 // pred_fallthru
      _
    // Predicated region
    $region26: #{tpu_custom_call.1} parent=1 // pred_check
      _
    $region27: #{tpu_custom_call.1} parent=1 // pred_check_branch
      %80 = sbr.rel (0) target = $region29
    $region28: #{tpu_custom_call.1} parent=1 // pred_region
      _
    $region29: #{tpu_custom_call.1} parent=1 // pred_fallthru
      _
    // Predicated region
    $region30: #{tpu_custom_call.1} parent=1 // pred_check
      _
    $region31: #{tpu_custom_call.1} parent=1 // pred_check_branch
      %82 = sbr.rel (0) target = $region33
    $region32: #{tpu_custom_call.1} parent=1 // pred_region
      _
    $region33: #{tpu_custom_call.1} parent=1 // pred_fallthru
      _
    // Predicated region
    $region34: #{tpu_custom_call.1} parent=1 // pred_check
      _
    $region35: #{tpu_custom_call.1} parent=1 // pred_check_branch
      %84 = sbr.rel (0) target = $region37
    $region36: #{tpu_custom_call.1} parent=1 // pred_region
      %85 = dma.done [#allocation3], 2048
    $region37: #{tpu_custom_call.1} parent=1 // pred_fallthru
      _
    // Predicated region
    $region38: #{tpu_custom_call.1} parent=1 // pred_check
      _
    $region39: #{tpu_custom_call.1} parent=1 // pred_check_branch
      %87 = sbr.rel (0) target = $region41
    $region40: #{tpu_custom_call.1} parent=1 // pred_region
      %88 = dma.done [#allocation6], 2048
    $region41: #{tpu_custom_call.1} parent=1 // pred_fallthru
      _
    // Predicated region
    $region42: #{tpu_custom_call.1} parent=1 // pred_check
      _
    $region43: #{tpu_custom_call.1} parent=1 // pred_check_branch
      %90 = sbr.rel (0) target = $region45
    $region44: #{tpu_custom_call.1} parent=1 // pred_region
      %91 = dma.done [#allocation6], 2048
    $region45: #{tpu_custom_call.1} parent=1 // pred_fallthru
      _
    // Predicated region
    $region46: #{tpu_custom_call.1} parent=1 // pred_check
      _
    $region47: #{tpu_custom_call.1} parent=1 // pred_check_branch
      %93 = sbr.rel (0) target = $region49
    $region48: #{tpu_custom_call.1} parent=1 // pred_region
      %94 = dma.done [#allocation9], 2048
    $region49: #{tpu_custom_call.1} parent=1 // pred_fallthru
      _
    // Predicated region
    $region50: #{tpu_custom_call.1} parent=1 // pred_check
      _
    $region51: #{tpu_custom_call.1} parent=1 // pred_check_branch
      %96 = sbr.rel (0) target = $region53
    $region52: #{tpu_custom_call.1} parent=1 // pred_region
      %97 = dma.done [#allocation9], 2048
    $region53: #{tpu_custom_call.1} parent=1 // pred_fallthru
      _
    %v99 = vld [vmem:[#allocation2] sm:$0xf]
    %v100 = vld [vmem:[#allocation2 + $0x4] sm:$0xf]
    %v101 = vld [vmem:[#allocation2 + $0x8] sm:$0xf]
    %v102 = vld [vmem:[#allocation2 + $0xc] sm:$0xf]
    %v103 = vld [vmem:[#allocation2 + $0x10] sm:$0xf]
    %v104 = vld [vmem:[#allocation2 + $0x14] sm:$0xf]
    %v105 = vld [vmem:[#allocation2 + $0x18] sm:$0xf]
    %v106 = vld [vmem:[#allocation2 + $0x1c] sm:$0xf]
    %v107 = vld [vmem:[#allocation2 + $0x20] sm:$0xf]
    %v108 = vld [vmem:[#allocation2 + $0x24] sm:$0xf]
    %v109 = vld [vmem:[#allocation2 + $0x28] sm:$0xf]
    %v110 = vld [vmem:[#allocation2 + $0x2c] sm:$0xf]
    %v111 = vld [vmem:[#allocation2 + $0x30] sm:$0xf]
    %v112 = vld [vmem:[#allocation2 + $0x34] sm:$0xf]
    %v113 = vld [vmem:[#allocation2 + $0x38] sm:$0xf]
    %v114 = vld [vmem:[#allocation2 + $0x3c] sm:$0xf]
    %v115 = vld [vmem:[#allocation2 + $0x40] sm:$0xf]
    %v116 = vld [vmem:[#allocation2 + $0x44] sm:$0xf]
    %v117 = vld [vmem:[#allocation2 + $0x48] sm:$0xf]
    %v118 = vld [vmem:[#allocation2 + $0x4c] sm:$0xf]
    %v119 = vld [vmem:[#allocation2 + $0x50] sm:$0xf]
    %v120 = vld [vmem:[#allocation2 + $0x54] sm:$0xf]
    %v121 = vld [vmem:[#allocation2 + $0x58] sm:$0xf]
    %v122 = vld [vmem:[#allocation2 + $0x5c] sm:$0xf]
    %v123 = vld [vmem:[#allocation2 + $0x60] sm:$0xf]
    %v124 = vld [vmem:[#allocation2 + $0x64] sm:$0xf]
    %v125 = vld [vmem:[#allocation2 + $0x68] sm:$0xf]
    %v126 = vld [vmem:[#allocation2 + $0x6c] sm:$0xf]
    %v127 = vld [vmem:[#allocation2 + $0x70] sm:$0xf]
    %v128 = vld [vmem:[#allocation2 + $0x74] sm:$0xf]
    %v129 = vld [vmem:[#allocation2 + $0x78] sm:$0xf]
    %v130 = vld [vmem:[#allocation2 + $0x7c] sm:$0xf]
    %v131 = vunpack.c.l.bf16 %v99
    %v132 = vunpack.c.l.bf16 %v100
    %v133 = vunpack.c.l.bf16 %v101
    %v134 = vunpack.c.l.bf16 %v102
    %v135 = vunpack.c.l.bf16 %v103
    %v136 = vunpack.c.l.bf16 %v104
    %v137 = vunpack.c.l.bf16 %v105
    %v138 = vunpack.c.l.bf16 %v106
    %v139 = vunpack.c.l.bf16 %v107
    %v140 = vunpack.c.l.bf16 %v108
    %v141 = vunpack.c.l.bf16 %v109
    %v142 = vunpack.c.l.bf16 %v110
    %v143 = vunpack.c.l.bf16 %v111
    %v144 = vunpack.c.l.bf16 %v112
    %v145 = vunpack.c.l.bf16 %v113
    %v146 = vunpack.c.l.bf16 %v114
    %v147 = vunpack.c.l.bf16 %v115
    %v148 = vunpack.c.l.bf16 %v116
    %v149 = vunpack.c.l.bf16 %v117
    %v150 = vunpack.c.l.bf16 %v118
    %v151 = vunpack.c.l.bf16 %v119
    %v152 = vunpack.c.l.bf16 %v120
    %v153 = vunpack.c.l.bf16 %v121
    %v154 = vunpack.c.l.bf16 %v122
    %v155 = vunpack.c.l.bf16 %v123
    %v156 = vunpack.c.l.bf16 %v124
    %v157 = vunpack.c.l.bf16 %v125
    %v158 = vunpack.c.l.bf16 %v126
    %v159 = vunpack.c.l.bf16 %v127
    %v160 = vunpack.c.l.bf16 %v128
    %v161 = vunpack.c.l.bf16 %v129
    %v162 = vunpack.c.l.bf16 %v130
    %v163 = vadd.f32 %v131, %v132
    %v164 = vadd.f32 %v163, %v133
    %v165 = vadd.f32 %v164, %v134
    %v166 = vrot.slane %v165, 4
    %v167 = vadd.f32 %v165, %v166
    %v168 = vrot.slane %v167, 2
    %v169 = vadd.f32 %v167, %v168
    %v170 = vrot.slane %v169, 1
    %v171 = vadd.f32 %v169, %v170
    %v172 = vadd.f32 %v135, %v136
    %v173 = vadd.f32 %v172, %v137
    %v174 = vadd.f32 %v173, %v138
    %v175 = vrot.slane %v174, 4
    %v176 = vadd.f32 %v174, %v175
    %v177 = vrot.slane %v176, 2
    %v178 = vadd.f32 %v176, %v177
    %v179 = vrot.slane %v178, 1
    %v180 = vadd.f32 %v178, %v179
    %v181 = vadd.f32 %v139, %v140
    %v182 = vadd.f32 %v181, %v141
    %v183 = vadd.f32 %v182, %v142
    %v184 = vrot.slane %v183, 4
    %v185 = vadd.f32 %v183, %v184
    %v186 = vrot.slane %v185, 2
    %v187 = vadd.f32 %v185, %v186
    %v188 = vrot.slane %v187, 1
    %v189 = vadd.f32 %v187, %v188
    %v190 = vadd.f32 %v143, %v144
    %v191 = vadd.f32 %v190, %v145
    %v192 = vadd.f32 %v191, %v146
    %v193 = vrot.slane %v192, 4
    %v194 = vadd.f32 %v192, %v193
    %v195 = vrot.slane %v194, 2
    %v196 = vadd.f32 %v194, %v195
    %v197 = vrot.slane %v196, 1
    %v198 = vadd.f32 %v196, %v197
    %v199 = vadd.f32 %v147, %v148
    %v200 = vadd.f32 %v199, %v149
    %v201 = vadd.f32 %v200, %v150
    %v202 = vrot.slane %v201, 4
    %v203 = vadd.f32 %v201, %v202
    %v204 = vrot.slane %v203, 2
    %v205 = vadd.f32 %v203, %v204
    %v206 = vrot.slane %v205, 1
    %v207 = vadd.f32 %v205, %v206
    %v208 = vadd.f32 %v151, %v152
    %v209 = vadd.f32 %v208, %v153
    %v210 = vadd.f32 %v209, %v154
    %v211 = vrot.slane %v210, 4
    %v212 = vadd.f32 %v210, %v211
    %v213 = vrot.slane %v212, 2
    %v214 = vadd.f32 %v212, %v213
    %v215 = vrot.slane %v214, 1
    %v216 = vadd.f32 %v214, %v215
    %v217 = vadd.f32 %v155, %v156
    %v218 = vadd.f32 %v217, %v157
    %v219 = vadd.f32 %v218, %v158
    %v220 = vrot.slane %v219, 4
    %v221 = vadd.f32 %v219, %v220
    %v222 = vrot.slane %v221, 2
    %v223 = vadd.f32 %v221, %v222
    %v224 = vrot.slane %v223, 1
    %v225 = vadd.f32 %v223, %v224
    %v226 = vadd.f32 %v159, %v160
    %v227 = vadd.f32 %v226, %v161
    %v228 = vadd.f32 %v227, %v162
    %v229 = vrot.slane %v228, 4
    %v230 = vadd.f32 %v228, %v229
    %v231 = vrot.slane %v230, 2
    %v232 = vadd.f32 %v230, %v231
    %v233 = vrot.slane %v232, 1
    %v234 = vadd.f32 %v232, %v233
    %v235 = vmul.f32 %v171, 0.03125
    %v236 = vmul.f32 %v180, 0.03125
    %v237 = vmul.f32 %v189, 0.03125
    %v238 = vmul.f32 %v198, 0.03125
    %v239 = vmul.f32 %v207, 0.03125
    %v240 = vmul.f32 %v216, 0.03125
    %v241 = vmul.f32 %v225, 0.03125
    %v242 = vmul.f32 %v234, 0.03125
    %v243 = vld [vmem:[#allocation5] sm:$0xf]
    %v244 = vld [vmem:[#allocation5 + $0x4] sm:$0xf]
    %v245 = vld [vmem:[#allocation5 + $0x8] sm:$0xf]
    %v246 = vld [vmem:[#allocation5 + $0xc] sm:$0xf]
    %v247 = vld [vmem:[#allocation5 + $0x10] sm:$0xf]
    %v248 = vld [vmem:[#allocation5 + $0x14] sm:$0xf]
    %v249 = vld [vmem:[#allocation5 + $0x18] sm:$0xf]
    %v250 = vld [vmem:[#allocation5 + $0x1c] sm:$0xf]
    %v251 = vld [vmem:[#allocation5 + $0x20] sm:$0xf]
    %v252 = vld [vmem:[#allocation5 + $0x24] sm:$0xf]
    %v253 = vld [vmem:[#allocation5 + $0x28] sm:$0xf]
    %v254 = vld [vmem:[#allocation5 + $0x2c] sm:$0xf]
    %v255 = vld [vmem:[#allocation5 + $0x30] sm:$0xf]
    %v256 = vld [vmem:[#allocation5 + $0x34] sm:$0xf]
    %v257 = vld [vmem:[#allocation5 + $0x38] sm:$0xf]
    %v258 = vld [vmem:[#allocation5 + $0x3c] sm:$0xf]
    %v259 = vld [vmem:[#allocation5 + $0x40] sm:$0xf]
    %v260 = vld [vmem:[#allocation5 + $0x44] sm:$0xf]
    %v261 = vld [vmem:[#allocation5 + $0x48] sm:$0xf]
    %v262 = vld [vmem:[#allocation5 + $0x4c] sm:$0xf]
    %v263 = vld [vmem:[#allocation5 + $0x50] sm:$0xf]
    %v264 = vld [vmem:[#allocation5 + $0x54] sm:$0xf]
    %v265 = vld [vmem:[#allocation5 + $0x58] sm:$0xf]
    %v266 = vld [vmem:[#allocation5 + $0x5c] sm:$0xf]
    %v267 = vld [vmem:[#allocation5 + $0x60] sm:$0xf]
    %v268 = vld [vmem:[#allocation5 + $0x64] sm:$0xf]
    %v269 = vld [vmem:[#allocation5 + $0x68] sm:$0xf]
    %v270 = vld [vmem:[#allocation5 + $0x6c] sm:$0xf]
    %v271 = vld [vmem:[#allocation5 + $0x70] sm:$0xf]
    %v272 = vld [vmem:[#allocation5 + $0x74] sm:$0xf]
    %v273 = vld [vmem:[#allocation5 + $0x78] sm:$0xf]
    %v274 = vld [vmem:[#allocation5 + $0x7c] sm:$0xf]
    %v275 = vunpack.c.l.bf16 %v243
    %v276 = vunpack.c.l.bf16 %v244
    %v277 = vunpack.c.l.bf16 %v245
    %v278 = vunpack.c.l.bf16 %v246
    %v279 = vunpack.c.l.bf16 %v247
    %v280 = vunpack.c.l.bf16 %v248
    %v281 = vunpack.c.l.bf16 %v249
    %v282 = vunpack.c.l.bf16 %v250
    %v283 = vunpack.c.l.bf16 %v251
    %v284 = vunpack.c.l.bf16 %v252
    %v285 = vunpack.c.l.bf16 %v253
    %v286 = vunpack.c.l.bf16 %v254
    %v287 = vunpack.c.l.bf16 %v255
    %v288 = vunpack.c.l.bf16 %v256
    %v289 = vunpack.c.l.bf16 %v257
    %v290 = vunpack.c.l.bf16 %v258
    %v291 = vunpack.c.l.bf16 %v259
    %v292 = vunpack.c.l.bf16 %v260
    %v293 = vunpack.c.l.bf16 %v261
    %v294 = vunpack.c.l.bf16 %v262
    %v295 = vunpack.c.l.bf16 %v263
    %v296 = vunpack.c.l.bf16 %v264
    %v297 = vunpack.c.l.bf16 %v265
    %v298 = vunpack.c.l.bf16 %v266
    %v299 = vunpack.c.l.bf16 %v267
    %v300 = vunpack.c.l.bf16 %v268
    %v301 = vunpack.c.l.bf16 %v269
    %v302 = vunpack.c.l.bf16 %v270
    %v303 = vunpack.c.l.bf16 %v271
    %v304 = vunpack.c.l.bf16 %v272
    %v305 = vunpack.c.l.bf16 %v273
    %v306 = vunpack.c.l.bf16 %v274
    %v307 = vadd.f32 %v275, %v276
    %v308 = vadd.f32 %v307, %v277
    %v309 = vadd.f32 %v308, %v278
    %v310 = vrot.slane %v309, 4
    %v311 = vadd.f32 %v309, %v310
    %v312 = vrot.slane %v311, 2
    %v313 = vadd.f32 %v311, %v312
    %v314 = vrot.slane %v313, 1
    %v315 = vadd.f32 %v313, %v314
    %v316 = vadd.f32 %v279, %v280
    %v317 = vadd.f32 %v316, %v281
    %v318 = vadd.f32 %v317, %v282
    %v319 = vrot.slane %v318, 4
    %v320 = vadd.f32 %v318, %v319
    %v321 = vrot.slane %v320, 2
    %v322 = vadd.f32 %v320, %v321
    %v323 = vrot.slane %v322, 1
    %v324 = vadd.f32 %v322, %v323
    %v325 = vadd.f32 %v283, %v284
    %v326 = vadd.f32 %v325, %v285
    %v327 = vadd.f32 %v326, %v286
    %v328 = vrot.slane %v327, 4
    %v329 = vadd.f32 %v327, %v328
    %v330 = vrot.slane %v329, 2
    %v331 = vadd.f32 %v329, %v330
    %v332 = vrot.slane %v331, 1
    %v333 = vadd.f32 %v331, %v332
    %v334 = vadd.f32 %v287, %v288
    %v335 = vadd.f32 %v334, %v289
    %v336 = vadd.f32 %v335, %v290
    %v337 = vrot.slane %v336, 4
    %v338 = vadd.f32 %v336, %v337
    %v339 = vrot.slane %v338, 2
    %v340 = vadd.f32 %v338, %v339
    %v341 = vrot.slane %v340, 1
    %v342 = vadd.f32 %v340, %v341
    %v343 = vadd.f32 %v291, %v292
    %v344 = vadd.f32 %v343, %v293
    %v345 = vadd.f32 %v344, %v294
    %v346 = vrot.slane %v345, 4
    %v347 = vadd.f32 %v345, %v346
    %v348 = vrot.slane %v347, 2
    %v349 = vadd.f32 %v347, %v348
    %v350 = vrot.slane %v349, 1
    %v351 = vadd.f32 %v349, %v350
    %v352 = vadd.f32 %v295, %v296
    %v353 = vadd.f32 %v352, %v297
    %v354 = vadd.f32 %v353, %v298
    %v355 = vrot.slane %v354, 4
    %v356 = vadd.f32 %v354, %v355
    %v357 = vrot.slane %v356, 2
    %v358 = vadd.f32 %v356, %v357
    %v359 = vrot.slane %v358, 1
    %v360 = vadd.f32 %v358, %v359
    %v361 = vadd.f32 %v299, %v300
    %v362 = vadd.f32 %v361, %v301
    %v363 = vadd.f32 %v362, %v302
    %v364 = vrot.slane %v363, 4
    %v365 = vadd.f32 %v363, %v364
    %v366 = vrot.slane %v365, 2
    %v367 = vadd.f32 %v365, %v366
    %v368 = vrot.slane %v367, 1
    %v369 = vadd.f32 %v367, %v368
    %v370 = vadd.f32 %v303, %v304
    %v371 = vadd.f32 %v370, %v305
    %v372 = vadd.f32 %v371, %v306
    %v373 = vrot.slane %v372, 4
    %v374 = vadd.f32 %v372, %v373
    %v375 = vrot.slane %v374, 2
    %v376 = vadd.f32 %v374, %v375
    %v377 = vrot.slane %v376, 1
    %v378 = vadd.f32 %v376, %v377
    %v379 = vmul.f32 %v315, 0.03125
    %v380 = vmul.f32 %v324, 0.03125
    %v381 = vmul.f32 %v333, 0.03125
    %v382 = vmul.f32 %v342, 0.03125
    %v383 = vmul.f32 %v351, 0.03125
    %v384 = vmul.f32 %v360, 0.03125
    %v385 = vmul.f32 %v369, 0.03125
    %v386 = vmul.f32 %v378, 0.03125
    %v387 = vld [vmem:[#allocation7] sm:$0xf]
    %v388 = vld [vmem:[#allocation7 + $0x4] sm:$0xf]
    %v389 = vld [vmem:[#allocation7 + $0x8] sm:$0xf]
    %v390 = vld [vmem:[#allocation7 + $0xc] sm:$0xf]
    %v391 = vld [vmem:[#allocation7 + $0x10] sm:$0xf]
    %v392 = vld [vmem:[#allocation7 + $0x14] sm:$0xf]
    %v393 = vld [vmem:[#allocation7 + $0x18] sm:$0xf]
    %v394 = vld [vmem:[#allocation7 + $0x1c] sm:$0xf]
    %v395 = vld [vmem:[#allocation7 + $0x20] sm:$0xf]
    %v396 = vld [vmem:[#allocation7 + $0x24] sm:$0xf]
    %v397 = vld [vmem:[#allocation7 + $0x28] sm:$0xf]
    %v398 = vld [vmem:[#allocation7 + $0x2c] sm:$0xf]
    %v399 = vld [vmem:[#allocation7 + $0x30] sm:$0xf]
    %v400 = vld [vmem:[#allocation7 + $0x34] sm:$0xf]
    %v401 = vld [vmem:[#allocation7 + $0x38] sm:$0xf]
    %v402 = vld [vmem:[#allocation7 + $0x3c] sm:$0xf]
    %v403 = vld [vmem:[#allocation7 + $0x40] sm:$0xf]
    %v404 = vld [vmem:[#allocation7 + $0x44] sm:$0xf]
    %v405 = vld [vmem:[#allocation7 + $0x48] sm:$0xf]
    %v406 = vld [vmem:[#allocation7 + $0x4c] sm:$0xf]
    %v407 = vld [vmem:[#allocation7 + $0x50] sm:$0xf]
    %v408 = vld [vmem:[#allocation7 + $0x54] sm:$0xf]
    %v409 = vld [vmem:[#allocation7 + $0x58] sm:$0xf]
    %v410 = vld [vmem:[#allocation7 + $0x5c] sm:$0xf]
    %v411 = vld [vmem:[#allocation7 + $0x60] sm:$0xf]
    %v412 = vld [vmem:[#allocation7 + $0x64] sm:$0xf]
    %v413 = vld [vmem:[#allocation7 + $0x68] sm:$0xf]
    %v414 = vld [vmem:[#allocation7 + $0x6c] sm:$0xf]
    %v415 = vld [vmem:[#allocation7 + $0x70] sm:$0xf]
    %v416 = vld [vmem:[#allocation7 + $0x74] sm:$0xf]
    %v417 = vld [vmem:[#allocation7 + $0x78] sm:$0xf]
    %v418 = vld [vmem:[#allocation7 + $0x7c] sm:$0xf]
    %v419 = vunpack.c.l.bf16 %v387
    %v420 = vunpack.c.l.bf16 %v388
    %v421 = vunpack.c.l.bf16 %v389
    %v422 = vunpack.c.l.bf16 %v390
    %v423 = vunpack.c.l.bf16 %v391
    %v424 = vunpack.c.l.bf16 %v392
    %v425 = vunpack.c.l.bf16 %v393
    %v426 = vunpack.c.l.bf16 %v394
    %v427 = vunpack.c.l.bf16 %v395
    %v428 = vunpack.c.l.bf16 %v396
    %v429 = vunpack.c.l.bf16 %v397
    %v430 = vunpack.c.l.bf16 %v398
    %v431 = vunpack.c.l.bf16 %v399
    %v432 = vunpack.c.l.bf16 %v400
    %v433 = vunpack.c.l.bf16 %v401
    %v434 = vunpack.c.l.bf16 %v402
    %v435 = vunpack.c.l.bf16 %v403
    %v436 = vunpack.c.l.bf16 %v404
    %v437 = vunpack.c.l.bf16 %v405
    %v438 = vunpack.c.l.bf16 %v406
    %v439 = vunpack.c.l.bf16 %v407
    %v440 = vunpack.c.l.bf16 %v408
    %v441 = vunpack.c.l.bf16 %v409
    %v442 = vunpack.c.l.bf16 %v410
    %v443 = vunpack.c.l.bf16 %v411
    %v444 = vunpack.c.l.bf16 %v412
    %v445 = vunpack.c.l.bf16 %v413
    %v446 = vunpack.c.l.bf16 %v414
    %v447 = vunpack.c.l.bf16 %v415
    %v448 = vunpack.c.l.bf16 %v416
    %v449 = vunpack.c.l.bf16 %v417
    %v450 = vunpack.c.l.bf16 %v418
    %v451 = vadd.f32 %v419, %v420
    %v452 = vadd.f32 %v451, %v421
    %v453 = vadd.f32 %v452, %v422
    %v454 = vrot.slane %v453, 4
    %v455 = vadd.f32 %v453, %v454
    %v456 = vrot.slane %v455, 2
    %v457 = vadd.f32 %v455, %v456
    %v458 = vrot.slane %v457, 1
    %v459 = vadd.f32 %v457, %v458
    %v460 = vadd.f32 %v423, %v424
    %v461 = vadd.f32 %v460, %v425
    %v462 = vadd.f32 %v461, %v426
    %v463 = vrot.slane %v462, 4
    %v464 = vadd.f32 %v462, %v463
    %v465 = vrot.slane %v464, 2
    %v466 = vadd.f32 %v464, %v465
    %v467 = vrot.slane %v466, 1
    %v468 = vadd.f32 %v466, %v467
    %v469 = vadd.f32 %v427, %v428
    %v470 = vadd.f32 %v469, %v429
    %v471 = vadd.f32 %v470, %v430
    %v472 = vrot.slane %v471, 4
    %v473 = vadd.f32 %v471, %v472
    %v474 = vrot.slane %v473, 2
    %v475 = vadd.f32 %v473, %v474
    %v476 = vrot.slane %v475, 1
    %v477 = vadd.f32 %v475, %v476
    %v478 = vadd.f32 %v431, %v432
    %v479 = vadd.f32 %v478, %v433
    %v480 = vadd.f32 %v479, %v434
    %v481 = vrot.slane %v480, 4
    %v482 = vadd.f32 %v480, %v481
    %v483 = vrot.slane %v482, 2
    %v484 = vadd.f32 %v482, %v483
    %v485 = vrot.slane %v484, 1
    %v486 = vadd.f32 %v484, %v485
    %v487 = vadd.f32 %v435, %v436
    %v488 = vadd.f32 %v487, %v437
    %v489 = vadd.f32 %v488, %v438
    %v490 = vrot.slane %v489, 4
    %v491 = vadd.f32 %v489, %v490
    %v492 = vrot.slane %v491, 2
    %v493 = vadd.f32 %v491, %v492
    %v494 = vrot.slane %v493, 1
    %v495 = vadd.f32 %v493, %v494
    %v496 = vadd.f32 %v439, %v440
    %v497 = vadd.f32 %v496, %v441
    %v498 = vadd.f32 %v497, %v442
    %v499 = vrot.slane %v498, 4
    %v500 = vadd.f32 %v498, %v499
    %v501 = vrot.slane %v500, 2
    %v502 = vadd.f32 %v500, %v501
    %v503 = vrot.slane %v502, 1
    %v504 = vadd.f32 %v502, %v503
    %v505 = vadd.f32 %v443, %v444
    %v506 = vadd.f32 %v505, %v445
    %v507 = vadd.f32 %v506, %v446
    %v508 = vrot.slane %v507, 4
    %v509 = vadd.f32 %v507, %v508
    %v510 = vrot.slane %v509, 2
    %v511 = vadd.f32 %v509, %v510
    %v512 = vrot.slane %v511, 1
    %v513 = vadd.f32 %v511, %v512
    %v514 = vadd.f32 %v447, %v448
    %v515 = vadd.f32 %v514, %v449
    %v516 = vadd.f32 %v515, %v450
    %v517 = vrot.slane %v516, 4
    %v518 = vadd.f32 %v516, %v517
    %v519 = vrot.slane %v518, 2
    %v520 = vadd.f32 %v518, %v519
    %v521 = vrot.slane %v520, 1
    %v522 = vadd.f32 %v520, %v521
    %v523 = vmul.f32 %v459, 0.03125
    %v524 = vmul.f32 %v468, 0.03125
    %v525 = vmul.f32 %v477, 0.03125
    %v526 = vmul.f32 %v486, 0.03125
    %v527 = vmul.f32 %v495, 0.03125
    %v528 = vmul.f32 %v504, 0.03125
    %v529 = vmul.f32 %v513, 0.03125
    %v530 = vmul.f32 %v522, 0.03125
    %vm539 = vcmask 1041409
    %v540 = vsel %vm539, %v380, %v379
    %vm541 = vcmask 1042434
    %v542 = vsel %vm541, %v381, %v540
    %vm543 = vcmask 1043459
    %v544 = vsel %vm543, %v382, %v542
    %vm545 = vcmask 1044484
    %v546 = vsel %vm545, %v383, %v544
    %vm547 = vcmask 1045509
    %v548 = vsel %vm547, %v384, %v546
    %vm549 = vcmask 1046534
    %v550 = vsel %vm549, %v385, %v548
    %vm551 = vcmask 1047559
    %v552 = vsel %vm551, %v386, %v550
    %v562 = vsel %vm539, %v524, %v523
    %v563 = vsel %vm541, %v525, %v562
    %v564 = vsel %vm543, %v526, %v563
    %v565 = vsel %vm545, %v527, %v564
    %v566 = vsel %vm547, %v528, %v565
    %v567 = vsel %vm549, %v529, %v566
    %v568 = vsel %vm551, %v530, %v567
    %v570 = vld [vmem:[#allocation8] sm:$0xff]
    %v571 = vld [vmem:[#allocation8 + $0x8] sm:$0xff]
    %v572 = vld [vmem:[#allocation8 + $0x10] sm:$0xff]
    %v573 = vld [vmem:[#allocation8 + $0x18] sm:$0xff]
    %v574 = vld [vmem:[#allocation8 + $0x20] sm:$0xff]
    %v575 = vld [vmem:[#allocation8 + $0x28] sm:$0xff]
    %v576 = vld [vmem:[#allocation8 + $0x30] sm:$0xff]
    %v577 = vld [vmem:[#allocation8 + $0x38] sm:$0xff]
    %v578 = vld [vmem:[#allocation8 + $0x40] sm:$0xff]
    %v579 = vld [vmem:[#allocation8 + $0x48] sm:$0xff]
    %v580 = vld [vmem:[#allocation8 + $0x50] sm:$0xff]
    %v581 = vld [vmem:[#allocation8 + $0x58] sm:$0xff]
    %v582 = vld [vmem:[#allocation8 + $0x60] sm:$0xff]
    %v583 = vld [vmem:[#allocation8 + $0x68] sm:$0xff]
    %v584 = vld [vmem:[#allocation8 + $0x70] sm:$0xff]
    %v585 = vld [vmem:[#allocation8 + $0x78] sm:$0xff]
    %v586 = vld [vmem:[%s4] sm:$0x1]
    %v587 = vld [vmem:[#allocation10] sm:$0xff]
    %v588 = vld [vmem:[#allocation10 + $0x8] sm:$0xff]
    %v589 = vld [vmem:[#allocation10 + $0x10] sm:$0xff]
    %v590 = vld [vmem:[#allocation10 + $0x18] sm:$0xff]
    %v591 = vld [vmem:[#allocation10 + $0x20] sm:$0xff]
    %v592 = vld [vmem:[#allocation10 + $0x28] sm:$0xff]
    %v593 = vld [vmem:[#allocation10 + $0x30] sm:$0xff]
    %v594 = vld [vmem:[#allocation10 + $0x38] sm:$0xff]
    %v595 = vld [vmem:[#allocation10 + $0x40] sm:$0xff]
    %v596 = vld [vmem:[#allocation10 + $0x48] sm:$0xff]
    %v597 = vld [vmem:[#allocation10 + $0x50] sm:$0xff]
    %v598 = vld [vmem:[#allocation10 + $0x58] sm:$0xff]
    %v599 = vld [vmem:[#allocation10 + $0x60] sm:$0xff]
    %v600 = vld [vmem:[#allocation10 + $0x68] sm:$0xff]
    %v601 = vld [vmem:[#allocation10 + $0x70] sm:$0xff]
    %v602 = vld [vmem:[#allocation10 + $0x78] sm:$0xff]
    %v603 = vld [vmem:[%s6] sm:$0x1]
    %v604 = vld [vmem:[%s7] sm:$0xff]
    %v605 = vpack.c.bf16 %v568, %v552
    %v606 = vpack.c.bf16 %v571, %v570
    %v607 = vpack.c.bf16 %v573, %v572
    %v608 = vpack.c.bf16 %v575, %v574
    %v609 = vpack.c.bf16 %v577, %v576
    %v610 = vpack.c.bf16 %v579, %v578
    %v611 = vpack.c.bf16 %v581, %v580
    %v612 = vpack.c.bf16 %v583, %v582
    %v613 = vpack.c.bf16 %v585, %v584
    %v615 = vlaneseq
    %v616 = vshrl.u32 %v615, 7
    %v617 = vsub.s32 0, %v616
    %v618 = vrot.slane %v586, %v617
    %620 = vmatprep.subr.bf16.mxu0 0
    %621 = vmatpush1.bf16.msra.mxu0 %v606
    %622 = vmatprep.subr.bf16.mxu0 0
    %623 = vmatpush1.bf16.msra.mxu0 %v607
    %624 = vmatprep.subr.bf16.mxu0 0
    %625 = vmatpush1.bf16.msra.mxu0 %v608
    %626 = vmatprep.subr.bf16.mxu0 0
    %627 = vmatpush1.bf16.msra.mxu0 %v609
    %628 = vmatprep.subr.bf16.mxu0 0
    %629 = vmatpush1.bf16.msra.mxu0 %v610
    %630 = vmatprep.subr.bf16.mxu0 0
    %631 = vmatpush1.bf16.msra.mxu0 %v611
    %632 = vmatprep.subr.bf16.mxu0 0
    %633 = vmatpush1.bf16.msra.mxu0 %v612
    %634 = vmatprep.subr.bf16.mxu0 0
    %635 = vmatpush1.bf16.msra.mxu0 %v613
    %636 = vmatprep.subr.bf16.mxu0 0
    %637 = vmatpush1.bf16.msra.mxu0 0
    %638 = vmatprep.subr.bf16.mxu0 0
    %639 = vmatpush1.bf16.msra.mxu0 0
    %640 = vmatprep.subr.bf16.mxu0 0
    %641 = vmatpush1.bf16.msra.mxu0 0
    %642 = vmatprep.subr.bf16.mxu0 0
    %643 = vmatpush1.bf16.msra.mxu0 0
    %644 = vmatprep.subr.bf16.mxu0 0
    %645 = vmatpush1.bf16.msra.mxu0 0
    %646 = vmatprep.subr.bf16.mxu0 0
    %647 = vmatpush1.bf16.msra.mxu0 0
    %648 = vmatprep.subr.bf16.mxu0 0
    %649 = vmatpush1.bf16.msra.mxu0 0
    %650 = vmatprep.subr.bf16.mxu0 0
    %651 = vmatpush1.bf16.msra.mxu0 0
    %652 = vmatprep.mubr.bf16.mxu0 0
    %653 = vmatmul.mubr.bf16.gmra.mrb[0].mxu0 %v605
    %v654 = vpop.f32.mrb[0].mxu0
    %v655 = vadd.f32 %v618, %v654
    %v656 = vpop.f32.mrb[0].mxu0
    %v657 = vpop.f32.mrb[0].mxu0
    %v658 = vadd.f32 %v618, %v657
    %v659 = vpop.f32.mrb[0].mxu0
    %660 = vdwg.mxu0
    %v661 = vmax.f32 %v655, 0.0
    %v662 = vmax.f32 %v658, 0.0
    %v663 = vpack.c.bf16 %v662, %v661
    %v664 = vpack.c.bf16 %v588, %v587
    %v665 = vpack.c.bf16 %v590, %v589
    %v666 = vpack.c.bf16 %v592, %v591
    %v667 = vpack.c.bf16 %v594, %v593
    %v668 = vpack.c.bf16 %v596, %v595
    %v669 = vpack.c.bf16 %v598, %v597
    %v670 = vpack.c.bf16 %v600, %v599
    %v671 = vpack.c.bf16 %v602, %v601
    %v673 = vlaneseq
    %v674 = vshrl.u32 %v673, 7
    %v675 = vsub.s32 0, %v674
    %v676 = vrot.slane %v603, %v675
    %678 = vmatprep.subr.bf16.mxu0 0
    %679 = vmatpush1.bf16.msra.mxu0 %v664
    %680 = vmatprep.subr.bf16.mxu0 0
    %681 = vmatpush1.bf16.msra.mxu0 %v665
    %682 = vmatprep.subr.bf16.mxu0 0
    %683 = vmatpush1.bf16.msra.mxu0 %v666
    %684 = vmatprep.subr.bf16.mxu0 0
    %685 = vmatpush1.bf16.msra.mxu0 %v667
    %686 = vmatprep.subr.bf16.mxu0 0
    %687 = vmatpush1.bf16.msra.mxu0 %v668
    %688 = vmatprep.subr.bf16.mxu0 0
    %689 = vmatpush1.bf16.msra.mxu0 %v669
    %690 = vmatprep.subr.bf16.mxu0 0
    %691 = vmatpush1.bf16.msra.mxu0 %v670
    %692 = vmatprep.subr.bf16.mxu0 0
    %693 = vmatpush1.bf16.msra.mxu0 %v671
    %694 = vmatprep.subr.bf16.mxu0 0
    %695 = vmatpush1.bf16.msra.mxu0 0
    %696 = vmatprep.subr.bf16.mxu0 0
    %697 = vmatpush1.bf16.msra.mxu0 0
    %698 = vmatprep.subr.bf16.mxu0 0
    %699 = vmatpush1.bf16.msra.mxu0 0
    %700 = vmatprep.subr.bf16.mxu0 0
    %701 = vmatpush1.bf16.msra.mxu0 0
    %702 = vmatprep.subr.bf16.mxu0 0
    %703 = vmatpush1.bf16.msra.mxu0 0
    %704 = vmatprep.subr.bf16.mxu0 0
    %705 = vmatpush1.bf16.msra.mxu0 0
    %706 = vmatprep.subr.bf16.mxu0 0
    %707 = vmatpush1.bf16.msra.mxu0 0
    %708 = vmatprep.subr.bf16.mxu0 0
    %709 = vmatpush1.bf16.msra.mxu0 0
    %710 = vmatprep.mubr.bf16.mxu0 0
    %711 = vmatmul.mubr.bf16.gmra.mrb[0].mxu0 %v663
    %v712 = vpop.f32.mrb[0].mxu0
    %v713 = vadd.f32 %v676, %v712
    %v714 = vpop.f32.mrb[0].mxu0
    %v715 = vpop.f32.mrb[0].mxu0
    %v716 = vadd.f32 %v676, %v715
    %v717 = vpop.f32.mrb[0].mxu0
    %718 = vdwg.mxu0
    %v719 = vmul.f32 %v713, %v713
    %v720 = vmul.f32 %v716, %v716
    %721 = vadd.xlane.f32.xlu0 %v719
    %v722 = vpop.xlane.xlu0 %721
    %723 = vadd.xlane.f32.xlu0 %v720
    %v724 = vpop.xlane.xlu0 %723
    %v725 = vadd.f32 %v722, 1e-24
    %v726 = vadd.f32 %v724, 1e-24
    %v727 = vrsqrt.pop %v725
    %v728 = vrsqrt.pop %v726
    %v729 = vmul.f32 %v713, %v727
    %v730 = vmul.f32 %v716, %v728
    %v731 = vpack.c.bf16 %v730, %v729
    %732 = vmatprep.subr.bf16.mxu0 0
    %733 = vmatpush1.bf16.xpose.msra.mxu0 %v731
    %734 = vmatprep.subr.bf16.mxu0 0
    %735 = vmatpush1.bf16.xpose.msra.mxu0 0
    %736 = vmatprep.subr.bf16.mxu0 0
    %737 = vmatpush1.bf16.xpose.msra.mxu0 0
    %738 = vmatprep.subr.bf16.mxu0 0
    %739 = vmatpush1.bf16.xpose.msra.mxu0 0
    %740 = vmatprep.subr.bf16.mxu0 0
    %741 = vmatpush1.bf16.xpose.msra.mxu0 0
    %742 = vmatprep.subr.bf16.mxu0 0
    %743 = vmatpush1.bf16.xpose.msra.mxu0 0
    %744 = vmatprep.subr.bf16.mxu0 0
    %745 = vmatpush1.bf16.xpose.msra.mxu0 0
    %746 = vmatprep.subr.bf16.mxu0 0
    %747 = vmatpush1.bf16.xpose.msra.mxu0 0
    %748 = vmatprep.subr.bf16.mxu0 0
    %749 = vmatpush1.bf16.xpose.msra.mxu0 0
    %750 = vmatprep.subr.bf16.mxu0 0
    %751 = vmatpush1.bf16.xpose.msra.mxu0 0
    %752 = vmatprep.subr.bf16.mxu0 0
    %753 = vmatpush1.bf16.xpose.msra.mxu0 0
    %754 = vmatprep.subr.bf16.mxu0 0
    %755 = vmatpush1.bf16.xpose.msra.mxu0 0
    %756 = vmatprep.subr.bf16.mxu0 0
    %757 = vmatpush1.bf16.xpose.msra.mxu0 0
    %758 = vmatprep.subr.bf16.mxu0 0
    %759 = vmatpush1.bf16.xpose.msra.mxu0 0
    %760 = vmatprep.subr.bf16.mxu0 0
    %761 = vmatpush1.bf16.xpose.msra.mxu0 0
    %762 = vmatprep.subr.bf16.mxu0 0
    %763 = vmatpush1.bf16.xpose.msra.mxu0 0
    %764 = vmatprep.mubr.bf16.mxu0 0
    %765 = vmatmul.mubr.bf16.gmra.mrb[0].mxu0 %v731
    %v766 = vpop.f32.mrb[0].mxu0
    %v767 = vadd.f32 0.0, %v766
    %v768 = vpop.f32.mrb[0].mxu0
    %v769 = vpop.f32.mrb[0].mxu0
    %v770 = vadd.f32 0.0, %v769
    %v771 = vpop.f32.mrb[0].mxu0
    %772 = vdwg.mxu0
    %v773 = vmul.f32 %v767, 2.0
    %v774 = vmul.f32 %v770, 2.0
    %vm775 = vcmask 130048
    %v776 = vsel %vm775, %v773, -inf
    %777 = vmax.xlane.f32.xlu0 %v776
    %v778 = vpop.xlane.xlu0 %777
    %v779 = vsel %vm775, %v774, -inf
    %780 = vmax.xlane.f32.xlu0 %v779
    %v781 = vpop.xlane.xlu0 %780
    %v782 = vsub.f32 %v773, %v778
    %v783 = vsub.f32 %v774, %v781
    %v784 = vlaneseq
    %v785 = vshrl.u32 %v784, 7
    %v786 = vadd.s32 %v785, 8
    %v787 = vlaneseq
    %v788 = vand.u32 %v787, 127
    %vm789 = vcmp.ne.s32.totalorder %v785, %v788
    %vm790 = vcmp.ne.s32.totalorder %v786, %v788
    %v791 = vsel %vm789, 1, 0
    %v792 = vsel %vm790, 1, 0
    %v793 = vcvt.s32.f32 %v791
    %v794 = vcvt.s32.f32 %v792
    %v795 = vadd.s32 %v786, 8
    %vm796 = vcmp.eq.s32.totalorder %v788, %v786
    %vm797 = vcmp.eq.s32.totalorder %v788, %v795
    %v798 = vsub.s32 %v785, 8
    %vm799 = vcmp.eq.s32.totalorder %v788, %v798
    %vm800 = vcmp.eq.s32.totalorder %v788, %v785
    %vm801 = vmor %vm796, %vm799
    %vm802 = vmor %vm797, %vm800
    %v803 = vsel %vm801, 1, 0
    %v804 = vsel %vm802, 1, 0
    %v805 = vcvt.s32.f32 %v803
    %v806 = vcvt.s32.f32 %v804
    %v807 = vmul.f32 %v782, 1.442695
    %v808 = vpow.pop %v807
    %v809 = vmul.f32 %v783, 1.442695
    %v810 = vpow.pop %v809
    %v811 = vmul.f32 %v808, %v793
    %v812 = vmul.f32 %v810, %v794
    %v813 = vsel %vm775, %v811, 0.0
    %814 = vadd.xlane.f32.xlu0 %v813
    %v815 = vpop.xlane.xlu0 %814
    %v816 = vsel %vm775, %v812, 0.0
    %817 = vadd.xlane.f32.xlu0 %v816
    %v818 = vpop.xlane.xlu0 %817
    %v819 = vlog2.pop %v815
    %v820 = vmul.f32 %v819, 0.6931472
    %v821 = vlog2.pop %v818
    %v822 = vmul.f32 %v821, 0.6931472
    %v823 = vsub.f32 %v782, %v820
    %v824 = vsub.f32 %v783, %v822
    %v825 = vmul.f32 %v805, %v823
    %v826 = vmul.f32 %v806, %v824
    %v827 = vsel %vm775, %v825, 0.0
    %828 = vadd.xlane.f32.xlu0 %v827
    %v829 = vpop.xlane.xlu0 %828
    %v830 = vsel %vm775, %v826, 0.0
    %831 = vadd.xlane.f32.xlu0 %v830
    %v832 = vpop.xlane.xlu0 %831
    %v833 = vadd.f32 %v829, %v832
    %v834 = vrot.slane %v833, 4
    %v835 = vadd.f32 %v833, %v834
    %v836 = vrot.slane %v835, 2
    %v837 = vadd.f32 %v835, %v836
    %v838 = vrot.slane %v837, 1
    %v839 = vadd.f32 %v837, %v838
    %v840 = vmul.f32 %v839, -0.44642857
    %v849 = vsel %vm539, %v236, %v235
    %v850 = vsel %vm541, %v237, %v849
    %v851 = vsel %vm543, %v238, %v850
    %v852 = vsel %vm545, %v239, %v851
    %v853 = vsel %vm547, %v240, %v852
    %v854 = vsel %vm549, %v241, %v853
    %v855 = vsel %vm551, %v242, %v854
    %857 = vmatprep.subr.mxu0 0.0
    %858 = vmatpush1.xpose.msra.mxu0 %v604
    %859 = vmatprep.subr.mxu0 0.0
    %860 = vmatpush1.xpose.msra.mxu0 0.0
    %861 = vmatprep.subr.mxu0 0.0
    %862 = vmatpush1.xpose.msra.mxu0 0.0
    %863 = vmatprep.subr.mxu0 0.0
    %864 = vmatpush1.xpose.msra.mxu0 0.0
    %865 = vmatprep.subr.mxu0 0.0
    %866 = vmatpush1.xpose.msra.mxu0 0.0
    %867 = vmatprep.subr.mxu0 0.0
    %868 = vmatpush1.xpose.msra.mxu0 0.0
    %869 = vmatprep.subr.mxu0 0.0
    %870 = vmatpush1.xpose.msra.mxu0 0.0
    %871 = vmatprep.subr.mxu0 0.0
    %872 = vmatpush1.xpose.msra.mxu0 0.0
    %873 = vmatprep.subr.mxu0 0.0
    %874 = vmatpush1.xpose.msra.mxu0 0.0
    %875 = vmatprep.subr.mxu0 0.0
    %876 = vmatpush1.xpose.msra.mxu0 0.0
    %877 = vmatprep.subr.mxu0 0.0
    %878 = vmatpush1.xpose.msra.mxu0 0.0
    %879 = vmatprep.subr.mxu0 0.0
    %880 = vmatpush1.xpose.msra.mxu0 0.0
    %881 = vmatprep.subr.mxu0 0.0
    %882 = vmatpush1.xpose.msra.mxu0 0.0
    %883 = vmatprep.subr.mxu0 0.0
    %884 = vmatpush1.xpose.msra.mxu0 0.0
    %885 = vmatprep.subr.mxu0 0.0
    %886 = vmatpush1.xpose.msra.mxu0 0.0
    %887 = vmatprep.subr.mxu0 0.0
    %888 = vmatpush1.xpose.msra.mxu0 0.0
    %889 = vmatprep.subr.mxu0 0.0
    %890 = vmatpush1.xpose.msra.mxu0 0.0
    %891 = vmatprep.subr.mxu0 0.0
    %892 = vmatpush1.xpose.msra.mxu0 0.0
    %893 = vmatprep.subr.mxu0 0.0
    %894 = vmatpush1.xpose.msra.mxu0 0.0
    %895 = vmatprep.subr.mxu0 0.0
    %896 = vmatpush1.xpose.msra.mxu0 0.0
    %897 = vmatprep.subr.mxu0 0.0
    %898 = vmatpush1.xpose.msra.mxu0 0.0
    %899 = vmatprep.subr.mxu0 0.0
    %900 = vmatpush1.xpose.msra.mxu0 0.0
    %901 = vmatprep.subr.mxu0 0.0
    %902 = vmatpush1.xpose.msra.mxu0 0.0
    %903 = vmatprep.subr.mxu0 0.0
    %904 = vmatpush1.xpose.msra.mxu0 0.0
    %905 = vmatprep.subr.mxu0 0.0
    %906 = vmatpush1.xpose.msra.mxu0 0.0
    %907 = vmatprep.subr.mxu0 0.0
    %908 = vmatpush1.xpose.msra.mxu0 0.0
    %909 = vmatprep.subr.mxu0 0.0
    %910 = vmatpush1.xpose.msra.mxu0 0.0
    %911 = vmatprep.subr.mxu0 0.0
    %912 = vmatpush1.xpose.msra.mxu0 0.0
    %913 = vmatprep.subr.mxu0 0.0
    %914 = vmatpush1.xpose.msra.mxu0 0.0
    %915 = vmatprep.subr.mxu0 0.0
    %916 = vmatpush1.xpose.msra.mxu0 0.0
    %917 = vmatprep.subr.mxu0 0.0
    %918 = vmatpush1.xpose.msra.mxu0 0.0
    %919 = vmatprep.subr.mxu0 0.0
    %920 = vmatpush1.xpose.msra.mxu0 0.0
    %921 = vmatprep.mubr.f32.mxu0 0.0
    %922 = vmatmul.mubr.f32.gmra.mrb[0].mxu0 %v855
    %v923 = vpop.f32.mrb[0].mxu0
    %v924 = vadd.f32 0.0, %v923
    %v925 = vpop.f32.mrb[0].mxu0
    %926 = vdwg.mxu0
    %v927 = vmul.f32 %v235, %v235
    %v928 = vmul.f32 %v236, %v236
    %v929 = vmul.f32 %v237, %v237
    %v930 = vmul.f32 %v238, %v238
    %v931 = vmul.f32 %v239, %v239
    %v932 = vmul.f32 %v240, %v240
    %v933 = vmul.f32 %v241, %v241
    %v934 = vmul.f32 %v242, %v242
    %v943 = vsel %vm539, %v928, %v927
    %v944 = vsel %vm541, %v929, %v943
    %v945 = vsel %vm543, %v930, %v944
    %v946 = vsel %vm545, %v931, %v945
    %v947 = vsel %vm547, %v932, %v946
    %v948 = vsel %vm549, %v933, %v947
    %v949 = vsel %vm551, %v934, %v948
    %951 = vadd.xlane.f32.xlu0 %v949
    %v952 = vpop.xlane.xlu0 %951
    %v953 = vmul.f32 %v604, %v604
    %954 = vmatprep.subr.mxu0 0.0
    %955 = vmatpush1.xpose.msra.mxu0 %v953
    %956 = vmatprep.subr.mxu0 0.0
    %957 = vmatpush1.xpose.msra.mxu0 0.0
    %958 = vmatprep.subr.mxu0 0.0
    %959 = vmatpush1.xpose.msra.mxu0 0.0
    %960 = vmatprep.subr.mxu0 0.0
    %961 = vmatpush1.xpose.msra.mxu0 0.0
    %962 = vmatprep.subr.mxu0 0.0
    %963 = vmatpush1.xpose.msra.mxu0 0.0
    %964 = vmatprep.subr.mxu0 0.0
    %965 = vmatpush1.xpose.msra.mxu0 0.0
    %966 = vmatprep.subr.mxu0 0.0
    %967 = vmatpush1.xpose.msra.mxu0 0.0
    %968 = vmatprep.subr.mxu0 0.0
    %969 = vmatpush1.xpose.msra.mxu0 0.0
    %970 = vmatprep.subr.mxu0 0.0
    %971 = vmatpush1.xpose.msra.mxu0 0.0
    %972 = vmatprep.subr.mxu0 0.0
    %973 = vmatpush1.xpose.msra.mxu0 0.0
    %974 = vmatprep.subr.mxu0 0.0
    %975 = vmatpush1.xpose.msra.mxu0 0.0
    %976 = vmatprep.subr.mxu0 0.0
    %977 = vmatpush1.xpose.msra.mxu0 0.0
    %978 = vmatprep.subr.mxu0 0.0
    %979 = vmatpush1.xpose.msra.mxu0 0.0
    %980 = vmatprep.subr.mxu0 0.0
    %981 = vmatpush1.xpose.msra.mxu0 0.0
    %982 = vmatprep.subr.mxu0 0.0
    %983 = vmatpush1.xpose.msra.mxu0 0.0
    %984 = vmatprep.subr.mxu0 0.0
    %985 = vmatpush1.xpose.msra.mxu0 0.0
    %986 = vmatprep.subr.mxu0 0.0
    %987 = vmatpush1.xpose.msra.mxu0 0.0
    %988 = vmatprep.subr.mxu0 0.0
    %989 = vmatpush1.xpose.msra.mxu0 0.0
    %990 = vmatprep.subr.mxu0 0.0
    %991 = vmatpush1.xpose.msra.mxu0 0.0
    %992 = vmatprep.subr.mxu0 0.0
    %993 = vmatpush1.xpose.msra.mxu0 0.0
    %994 = vmatprep.subr.mxu0 0.0
    %995 = vmatpush1.xpose.msra.mxu0 0.0
    %996 = vmatprep.subr.mxu0 0.0
    %997 = vmatpush1.xpose.msra.mxu0 0.0
    %998 = vmatprep.subr.mxu0 0.0
    %999 = vmatpush1.xpose.msra.mxu0 0.0
    %1000 = vmatprep.subr.mxu0 0.0
    %1001 = vmatpush1.xpose.msra.mxu0 0.0
    %1002 = vmatprep.subr.mxu0 0.0
    %1003 = vmatpush1.xpose.msra.mxu0 0.0
    %1004 = vmatprep.subr.mxu0 0.0
    %1005 = vmatpush1.xpose.msra.mxu0 0.0
    %1006 = vmatprep.subr.mxu0 0.0
    %1007 = vmatpush1.xpose.msra.mxu0 0.0
    %1008 = vmatprep.subr.mxu0 0.0
    %1009 = vmatpush1.xpose.msra.mxu0 0.0
    %1010 = vmatprep.subr.mxu0 0.0
    %1011 = vmatpush1.xpose.msra.mxu0 0.0
    %1012 = vmatprep.subr.mxu0 0.0
    %1013 = vmatpush1.xpose.msra.mxu0 0.0
    %1014 = vmatprep.subr.mxu0 0.0
    %1015 = vmatpush1.xpose.msra.mxu0 0.0
    %1016 = vmatprep.subr.mxu0 0.0
    %1017 = vmatpush1.xpose.msra.mxu0 0.0
    %1018 = vmatprep.mubr.f32.mxu0 0.0
    %1019 = vmatmul.mubr.f32.gmra.mrb[0].mxu0 1.0
    %v1020 = vpop.f32.mrb[0].mxu0
    %v1021 = vadd.f32 0.0, %v1020
    %v1022 = vpop.f32.mrb[0].mxu0
    %1023 = vdwg.mxu0
    %v1024 = vlaneseq
    %v1025 = vshrl.u32 %v1024, 7
    %v1026 = vsub.s32 0, %v1025
    %v1027 = vrot.slane %v1021, %v1026
    %v1028 = vadd.f32 %v952, %v1027
    %v1029 = vmul.f32 %v924, 2.0
    %v1030 = vsub.f32 %v1028, %v1029
    %v1031 = vmax.f32 %v1030, 0.0
    %v1032 = vadd.f32 %v1031, 1.0
    %v1033 = vrcp.pop %v1032
    %v1034 = vmul.f32 1.0, %v1033
    %vm1035 = vcmask 64512
    %v1036 = vsel %vm1035, %v1034, 0.0
    %1037 = vadd.xlane.f32.xlu0 %v1036
    %v1038 = vpop.xlane.xlu0 %1037
    %v1039 = vrcp.pop %v1038
    %v1040 = vmul.f32 %v1034, %v1039
    %v1041 = vmul.f32 %v1040, %v1040
    %v1042 = vsel %vm1035, %v1040, 0.0
    %v1043 = vrot.slane %v1042, 4
    %v1044 = vadd.f32 %v1042, %v1043
    %v1045 = vrot.slane %v1044, 2
    %v1046 = vadd.f32 %v1044, %v1045
    %v1047 = vrot.slane %v1046, 1
    %v1048 = vadd.f32 %v1046, %v1047
    %v1049 = vrcp.pop %v1048
    %v1050 = vmul.f32 %v1041, %v1049
    %v1051 = vsel %vm1035, %v1050, 0.0
    %1052 = vadd.xlane.f32.xlu0 %v1051
    %v1053 = vpop.xlane.xlu0 %1052
    %v1054 = vrcp.pop %v1053
    %v1055 = vmul.f32 %v1050, %v1054
    %v1056 = vadd.f32 %v1055, 1e-30
    %v1057 = vlog2.pop %v1056
    %v1058 = vmul.f32 %v1057, 0.6931472
    %v1059 = vadd.f32 %v1040, 1e-08
    %v1060 = vlog2.pop %v1059
    %v1061 = vmul.f32 %v1060, 0.6931472
    %v1062 = vsub.f32 %v1058, %v1061
    %v1063 = vmul.f32 %v1055, %v1062
    %v1064 = vsel %vm1035, %v1063, 0.0
    %1065 = vadd.xlane.f32.xlu0 %v1064
    %v1066 = vpop.xlane.xlu0 %1065
    %v1067 = vrot.slane %v1066, 4
    %v1068 = vadd.f32 %v1066, %v1067
    %v1069 = vrot.slane %v1068, 2
    %v1070 = vadd.f32 %v1068, %v1069
    %v1071 = vrot.slane %v1070, 1
    %v1072 = vadd.f32 %v1070, %v1071
    %v1073 = vmul.f32 %v1072, 0.125
    %vm1074 = vcmp.eq.s32.totalorder %v788, 0
    %v1075 = vsel %vm1074, %v840, %v1073
    %vm1076 = vcmask 8192
    %1077 = vst.msk [vmem:[#allocation11] sm:$0x1] %vm1076, %v1075
    // Predicated region
    $region54: #{tpu_custom_call.1} parent=1 // pred_check
      _
    $region55: #{tpu_custom_call.1} parent=1 // pred_check_branch
      %1079 = sbr.rel (0) target = $region57
    $region56: #{tpu_custom_call.1} parent=1 // pred_region
      %s1081 = ssub.s32 16, 16
      %1082 = vsyncadd [#allocation4], %s1081
      %s1084 = sshll.u32 [#allocation11], 4
      %s1085 = int_to_ptr.vmem [resolvable:$true] %s1084
      %1087 = dma.vmem_to_hbm [thread:$0]  %s1085, 16, %s8, [#allocation4]
    $region57: #{tpu_custom_call.1} parent=1 // pred_fallthru
      _
    // Predicated region
    $region58: #{tpu_custom_call.1} parent=1 // pred_check
      _
    $region59: #{tpu_custom_call.1} parent=1 // pred_check_branch
      %1089 = sbr.rel (0) target = $region61
    $region60: #{tpu_custom_call.1} parent=1 // pred_region
      %1090 = dma.done [#allocation4], 16
    $region61: #{tpu_custom_call.1} parent=1 // pred_fallthru
      _
    %1091 = vsyncpa [#allocation3], 1
    %1092 = vsyncpa [#allocation6], 1
    %1093 = vsyncpa [#allocation9], 1
    %1094 = vsyncpa [#allocation4], 1

</llo_original>
